<compile_context>
chip_gen: v6e
topology: v6e:2x2x1
jax: 0.10.0
libtpu: 0.0.40
codegen_flags: <defaults>
</compile_context>

<pallas_src>
import functools
import math

import jax
import jax.numpy as jnp
from jax.experimental import pallas as pl
from jax.experimental.pallas import tpu as pltpu


def _gelu_tanh(x):
    # TODO(synk): PyTorch nn.GELU() defaults to the exact erf form; the tanh
    # approximation (max abs deviation ~1e-3) is used because erf lowering is
    # not guaranteed in Mosaic.
    c = math.sqrt(2.0 / math.pi)
    return 0.5 * x * (1.0 + jnp.tanh(c * (x + 0.044715 * x * x * x)))


def _layer_norm(x, gamma, beta, eps=1e-5):
    mu = jnp.mean(x, axis=-1, keepdims=True)
    d = x - mu
    var = jnp.mean(d * d, axis=-1, keepdims=True)
    return d * jax.lax.rsqrt(var + eps) * gamma + beta


def _block_kernel(num_heads,
                  x_ref, wqkv_ref, bqkv_ref, wo_ref, bo_ref,
                  w1_ref, b1_ref, w2_ref, b2_ref,
                  g1_ref, bt1_ref, g2_ref, bt2_ref,
                  out_ref, heads_ref):
    f32 = jnp.float32
    x3 = x_ref[...]                                     # (TB, S, E)
    TB, S, E = x3.shape
    H = num_heads
    Dh = E // H
    scale = 1.0 / math.sqrt(Dh)

    # nan_to_num(nan=0.0) then clamp(-100, 100) (clip also maps +-inf -> +-100)
    x3 = jnp.where(jnp.isnan(x3), f32(0.0), x3)
    x3 = jnp.clip(x3, -100.0, 100.0)
    x = x3.reshape(TB * S, E)                           # big-M matmul operand

    # Fused QKV projection: one (TB*S, E) @ (E, 3E) MXU push.
    qkv = jnp.dot(x, wqkv_ref[...], preferred_element_type=f32) + bqkv_ref[...]
    q = qkv[:, 0 * E:1 * E].reshape(TB, S, E)
    k = qkv[:, 1 * E:2 * E].reshape(TB, S, E)
    v = qkv[:, 2 * E:3 * E].reshape(TB, S, E)

    # Per-head attention, batched over the TB rows of this block.
    for h in range(H):                                  # static, small H
        sl = slice(h * Dh, (h + 1) * Dh)
        qh, kh, vh = q[:, :, sl], k[:, :, sl], v[:, :, sl]
        s = jnp.einsum("bqd,bkd->bqk", qh, kh,
                       preferred_element_type=f32) * scale
        s = s - jnp.max(s, axis=-1, keepdims=True)      # stable softmax
        p = jnp.exp(s)
        p = p * pl.reciprocal(jnp.sum(p, axis=-1, keepdims=True), approx=True)
        oh = jnp.einsum("bqk,bkd->bqd", p, vh, preferred_element_type=f32)
        heads_ref[:, :, sl] = oh                        # lane-offset slab write

    # Output projection over the concatenated-head slab (single K=E matmul).
    heads = heads_ref[...].reshape(TB * S, E)
    attn = jnp.dot(heads, wo_ref[...], preferred_element_type=f32) + bo_ref[...]
    attn = jnp.clip(attn, -100.0, 100.0)

    x1 = _layer_norm(x + attn, g1_ref[...], bt1_ref[...])

    hdn = jnp.dot(x1, w1_ref[...], preferred_element_type=f32) + b1_ref[...]
    hdn = _gelu_tanh(hdn)
    ffn = jnp.dot(hdn, w2_ref[...], preferred_element_type=f32) + b2_ref[...]
    ffn = jnp.clip(ffn, -100.0, 100.0)                  # dropout = identity

    x2 = _layer_norm(x1 + ffn, g2_ref[...], bt2_ref[...])

    pooled = jnp.mean(x2.reshape(TB, S, E), axis=1)     # (TB, E): mean over seq
    pooled = jnp.where(jnp.isnan(pooled), f32(0.0), pooled)
    pooled = jnp.clip(pooled, -100.0, 100.0)
    out_ref[...] = pooled                               # lane-dense (TB, E)


def _pick_tb(B, tb_max=128):
    """Batch rows per grid step: amortize per-step overhead, keep >=2 grid
    steps when B permits (v7x megacore), and keep the block batch dim either a
    multiple of 8 or equal to the (padded) batch so the 2-D output BlockSpec
    satisfies the (8, 128) tiling rule."""
    if B <= 8:
        return B
    return min(tb_max, 8 * ((B + 15) // 16))


def tabular_transformer_block(x, params, *, num_heads, tb_max=128):
    """Inference forward of TabularTransformerBlock.

    `params` uses PyTorch layouts: in_proj_weight (3E,E), in_proj_bias (3E,),
    out_proj_weight (E,E), out_proj_bias (E,), ffn_w1 (F,E), ffn_b1 (F,),
    ffn_w2 (E,F), ffn_b2 (E,), norm{1,2}_weight/bias (E,).
    """
    f32 = jnp.float32
    E = params["norm1_weight"].shape[0]
    F = params["ffn_b1"].shape[0]
    assert E % num_heads == 0
    x = jnp.asarray(x, f32)

    # Same 2-D -> 3-D promotion as the PyTorch module (static shape logic).
    if x.ndim == 2:
        B, D = x.shape
        if D == E:
            x = x[:, None, :]
        else:
            seq_len = max(1, D // E)
            padded = seq_len * E
            if padded > D:
                x = jnp.pad(x, ((0, 0), (0, padded - D)))
            x = x.reshape(B, seq_len, E)
    B, S, _ = x.shape

    # Batch blocking: pad B up to a multiple of TB (zero rows are computed and
    # sliced off afterwards — cheap relative to per-step overhead savings).
    TB = _pick_tb(B, tb_max)
    num_blocks = pl.cdiv(B, TB)
    B_pad = num_blocks * TB
    if B_pad > B:
        x = jnp.pad(x, ((0, B_pad - B), (0, 0), (0, 0)))

    row = lambda a: jnp.asarray(a, f32).reshape(1, -1)
    wqkv = jnp.asarray(params["in_proj_weight"], f32).T          # (E, 3E)
    bqkv = row(params["in_proj_bias"])                           # (1, 3E)

    args = (
        x,
        wqkv, bqkv,
        jnp.asarray(params["out_proj_weight"], f32).T, row(params["out_proj_bias"]),
        jnp.asarray(params["ffn_w1"], f32).T, row(params["ffn_b1"]),
        jnp.asarray(params["ffn_w2"], f32).T, row(params["ffn_b2"]),
        row(params["norm1_weight"]), row(params["norm1_bias"]),
        row(params["norm2_weight"]), row(params["norm2_bias"]),
    )

    def const_spec(shape):
        n = len(shape)
        return pl.BlockSpec(shape, lambda b, _n=n: (0,) * _n)

    in_specs = [pl.BlockSpec((TB, S, E), lambda b: (b, 0, 0))]
    in_specs += [const_spec(a.shape) for a in args[1:]]

    weight_bytes = sum(int(a.size) for a in args[1:]) * 4
    flops = 2 * B_pad * S * (3 * E * E + E * E + 2 * E * F + 2 * S * E)
    bytes_accessed = 4 * (B_pad * S * E + B_pad * E) + weight_bytes
    transcendentals = B_pad * S * (S * num_heads + F)

    out = pl.pallas_call(
        functools.partial(_block_kernel, num_heads),
        out_shape=jax.ShapeDtypeStruct((B_pad, E), f32),
        grid=(num_blocks,),
        in_specs=in_specs,
        out_specs=pl.BlockSpec((TB, E), lambda b: (b, 0)),
        scratch_shapes=[pltpu.VMEM((TB, S, E), f32)],
        compiler_params=pltpu.CompilerParams(
            dimension_semantics=("parallel",)),
        cost_estimate=pl.CostEstimate(flops=flops,
                                      transcendentals=transcendentals,
                                      bytes_accessed=bytes_accessed),
    )(*args)
    return out[:B]


def _reference(x, params, num_heads):
    """Pure-JAX reference mirroring the kernel math (tanh-GELU, eps=1e-5)."""
    hp = jax.lax.Precision.HIGHEST
    f32 = jnp.float32
    E = params["norm1_weight"].shape[0]
    H, Dh = num_heads, E // num_heads

    x = jnp.asarray(x, f32)
    x = jnp.where(jnp.isnan(x), 0.0, x)
    x = jnp.clip(x, -100.0, 100.0)
    B, S, _ = x.shape

    wq, wk, wv = jnp.split(params["in_proj_weight"], 3, axis=0)
    bq, bk, bv = jnp.split(params["in_proj_bias"], 3, axis=0)
    q = jnp.einsum("bse,fe->bsf", x, wq, precision=hp) + bq
    k = jnp.einsum("bse,fe->bsf", x, wk, precision=hp) + bk
    v = jnp.einsum("bse,fe->bsf", x, wv, precision=hp) + bv
    qh = q.reshape(B, S, H, Dh).transpose(0, 2, 1, 3)
    kh = k.reshape(B, S, H, Dh).transpose(0, 2, 1, 3)
    vh = v.reshape(B, S, H, Dh).transpose(0, 2, 1, 3)
    s = jnp.einsum("bhqd,bhkd->bhqk", qh, kh, precision=hp) / jnp.sqrt(f32(Dh))
    p = jax.nn.softmax(s, axis=-1)
    o = jnp.einsum("bhqk,bhkd->bhqd", p, vh, precision=hp)
    o = o.transpose(0, 2, 1, 3).reshape(B, S, E)
    attn = jnp.einsum("bse,fe->bsf", o, params["out_proj_weight"], precision=hp)
    attn = attn + params["out_proj_bias"]
    attn = jnp.clip(attn, -100.0, 100.0)

    def ln(y, g, b):
        mu = jnp.mean(y, axis=-1, keepdims=True)
        d = y - mu
        var = jnp.mean(d * d, axis=-1, keepdims=True)
        return d * jax.lax.rsqrt(var + 1e-5) * g + b

    x1 = ln(x + attn, params["norm1_weight"], params["norm1_bias"])
    hdn = jnp.einsum("bse,fe->bsf", x1, params["ffn_w1"], precision=hp) + params["ffn_b1"]
    hdn = _gelu_tanh(hdn)
    ffn = jnp.einsum("bsf,ef->bse", hdn, params["ffn_w2"], precision=hp) + params["ffn_b2"]
    ffn = jnp.clip(ffn, -100.0, 100.0)
    x2 = ln(x1 + ffn, params["norm2_weight"], params["norm2_bias"])
    out = jnp.mean(x2, axis=1)
    out = jnp.where(jnp.isnan(out), 0.0, out)
    out = jnp.clip(out, -100.0, 100.0)
    return out


if __name__ == "__main__":
    embed_dim, num_heads, ff_dim = 32, 4, 64
    batch, seq = 2, 8

    key = jax.random.PRNGKey(0)
    ks = jax.random.split(key, 13)
    params = {
        "in_proj_weight": 0.08 * jax.random.normal(ks[0], (3 * embed_dim, embed_dim), jnp.float32),
        "in_proj_bias": 0.05 * jax.random.normal(ks[1], (3 * embed_dim,), jnp.float32),
        "out_proj_weight": 0.15 * jax.random.normal(ks[2], (embed_dim, embed_dim), jnp.float32),
        "out_proj_bias": 0.05 * jax.random.normal(ks[3], (embed_dim,), jnp.float32),
        "ffn_w1": 0.15 * jax.random.normal(ks[4], (ff_dim, embed_dim), jnp.float32),
        "ffn_b1": 0.05 * jax.random.normal(ks[5], (ff_dim,), jnp.float32),
        "ffn_w2": 0.12 * jax.random.normal(ks[6], (embed_dim, ff_dim), jnp.float32),
        "ffn_b2": 0.05 * jax.random.normal(ks[7], (embed_dim,), jnp.float32),
        "norm1_weight": 1.0 + 0.1 * jax.random.normal(ks[8], (embed_dim,), jnp.float32),
        "norm1_bias": 0.1 * jax.random.normal(ks[9], (embed_dim,), jnp.float32),
        "norm2_weight": 1.0 + 0.1 * jax.random.normal(ks[10], (embed_dim,), jnp.float32),
        "norm2_bias": 0.1 * jax.random.normal(ks[11], (embed_dim,), jnp.float32),
    }

    x = jax.random.normal(ks[12], (batch, seq, embed_dim), jnp.float32)
    x = x.at[0, 0, 0].set(jnp.nan)      # exercises nan_to_num(nan=0.0)
    x = x.at[1, 3, 5].set(1.0e6)        # exercises clamp(min=-100, max=100)

    out = tabular_transformer_block(x, params, num_heads=num_heads)
    out = jax.block_until_ready(out)

    ref = _reference(x, params, num_heads)
    assert out.shape == (batch, embed_dim)
    assert bool(jnp.all(jnp.isfinite(out)))
    assert jnp.allclose(out, ref, rtol=2e-3, atol=2e-3), float(jnp.max(jnp.abs(out - ref)))
    print("KERNEL_OK")
</pallas_src>

<mosaic_0001>
module attributes {stable_mosaic.version = 11 : i64} {
  func.func @_block_kernel(%arg0: i32, %arg1: memref<2x8x32xf32, #tpu.memory_space<vmem>>, %arg2: memref<32x96xf32, #tpu.memory_space<vmem>>, %arg3: memref<1x96xf32, #tpu.memory_space<vmem>>, %arg4: memref<32x32xf32, #tpu.memory_space<vmem>>, %arg5: memref<1x32xf32, #tpu.memory_space<vmem>>, %arg6: memref<32x64xf32, #tpu.memory_space<vmem>>, %arg7: memref<1x64xf32, #tpu.memory_space<vmem>>, %arg8: memref<64x32xf32, #tpu.memory_space<vmem>>, %arg9: memref<1x32xf32, #tpu.memory_space<vmem>>, %arg10: memref<1x32xf32, #tpu.memory_space<vmem>>, %arg11: memref<1x32xf32, #tpu.memory_space<vmem>>, %arg12: memref<1x32xf32, #tpu.memory_space<vmem>>, %arg13: memref<1x32xf32, #tpu.memory_space<vmem>>, %arg14: memref<2x32xf32, #tpu.memory_space<vmem>>, %arg15: memref<2x8x32xf32, #tpu.memory_space<vmem>>) attributes {dimension_semantics = [#tpu.dimension_semantics<parallel>], iteration_bounds = array<i64: 1>, scalar_prefetch = 0 : i64, scratch_operands = 1 : i64, tpu.core_type = #tpu.core_type<tc>, window_params = [{transform_indices = @transform_0, window_bounds = array<i64: 2, 8, 32>}, {pipeline_mode = #tpu.pipeline_mode<synchronous>, transform_indices = @transform_1, window_bounds = array<i64: 32, 96>}, {pipeline_mode = #tpu.pipeline_mode<synchronous>, transform_indices = @transform_2, window_bounds = array<i64: 1, 96>}, {pipeline_mode = #tpu.pipeline_mode<synchronous>, transform_indices = @transform_3, window_bounds = array<i64: 32, 32>}, {pipeline_mode = #tpu.pipeline_mode<synchronous>, transform_indices = @transform_4, window_bounds = array<i64: 1, 32>}, {pipeline_mode = #tpu.pipeline_mode<synchronous>, transform_indices = @transform_5, window_bounds = array<i64: 32, 64>}, {pipeline_mode = #tpu.pipeline_mode<synchronous>, transform_indices = @transform_6, window_bounds = array<i64: 1, 64>}, {pipeline_mode = #tpu.pipeline_mode<synchronous>, transform_indices = @transform_7, window_bounds = array<i64: 64, 32>}, {pipeline_mode = #tpu.pipeline_mode<synchronous>, transform_indices = @transform_8, window_bounds = array<i64: 1, 32>}, {pipeline_mode = #tpu.pipeline_mode<synchronous>, transform_indices = @transform_9, window_bounds = array<i64: 1, 32>}, {pipeline_mode = #tpu.pipeline_mode<synchronous>, transform_indices = @transform_10, window_bounds = array<i64: 1, 32>}, {pipeline_mode = #tpu.pipeline_mode<synchronous>, transform_indices = @transform_11, window_bounds = array<i64: 1, 32>}, {pipeline_mode = #tpu.pipeline_mode<synchronous>, transform_indices = @transform_12, window_bounds = array<i64: 1, 32>}, {transform_indices = @transform_13, window_bounds = array<i64: 2, 32>}]} {
    %c0 = arith.constant 0 : index
    %c0_0 = arith.constant 0 : index
    %c0_1 = arith.constant 0 : index
    %0 = vector.load %arg1[%c0, %c0_0, %c0_1] : memref<2x8x32xf32, #tpu.memory_space<vmem>>, vector<2x8x32xf32>
    %1 = arith.cmpf one, %0, %0 : vector<2x8x32xf32>
    %cst = arith.constant 0.000000e+00 : f32
    %2 = vector.broadcast %cst : f32 to vector<2x8x32xf32>
    %3 = arith.select %1, %2, %0 : vector<2x8x32xi1>, vector<2x8x32xf32>
    %cst_2 = arith.constant -1.000000e+02 : f32
    %cst_3 = arith.constant 1.000000e+02 : f32
    %4 = vector.broadcast %cst_2 : f32 to vector<2x8x32xf32>
    %5 = arith.maximumf %4, %3 : vector<2x8x32xf32>
    %6 = vector.broadcast %cst_3 : f32 to vector<2x8x32xf32>
    %7 = arith.minimumf %6, %5 : vector<2x8x32xf32>
    %8 = vector.shape_cast %7 : vector<2x8x32xf32> to vector<16x32xf32>
    %c0_4 = arith.constant 0 : index
    %c0_5 = arith.constant 0 : index
    %9 = vector.load %arg2[%c0_4, %c0_5] : memref<32x96xf32, #tpu.memory_space<vmem>>, vector<32x96xf32>
    %cst_6 = arith.constant dense<0.000000e+00> : vector<16x96xf32>
    %10 = tpu.matmul %8, %9, %cst_6 {dimension_numbers = #tpu.dot_dimension_numbers<[1], [0], [0], [1], [0, 0, 1, 1], [], []>} : vector<16x32xf32>, vector<32x96xf32>, vector<16x96xf32> -> vector<16x96xf32>
    %c0_7 = arith.constant 0 : index
    %c0_8 = arith.constant 0 : index
    %11 = vector.load %arg3[%c0_7, %c0_8] : memref<1x96xf32, #tpu.memory_space<vmem>>, vector<1x96xf32>
    %12 = vector.broadcast %11 : vector<1x96xf32> to vector<16x96xf32>
    %13 = arith.addf %10, %12 : vector<16x96xf32>
    %14 = vector.extract_strided_slice %13 {offsets = [0, 0], sizes = [16, 32], strides = [1, 1]} : vector<16x96xf32> to vector<16x32xf32>
    %15 = vector.shape_cast %14 : vector<16x32xf32> to vector<2x8x32xf32>
    %16 = vector.extract_strided_slice %13 {offsets = [0, 32], sizes = [16, 32], strides = [1, 1]} : vector<16x96xf32> to vector<16x32xf32>
    %17 = vector.shape_cast %16 : vector<16x32xf32> to vector<2x8x32xf32>
    %18 = vector.extract_strided_slice %13 {offsets = [0, 64], sizes = [16, 32], strides = [1, 1]} : vector<16x96xf32> to vector<16x32xf32>
    %19 = vector.shape_cast %18 : vector<16x32xf32> to vector<2x8x32xf32>
    %20 = vector.extract_strided_slice %15 {offsets = [0, 0, 0], sizes = [2, 8, 8], strides = [1, 1, 1]} : vector<2x8x32xf32> to vector<2x8x8xf32>
    %21 = vector.extract_strided_slice %17 {offsets = [0, 0, 0], sizes = [2, 8, 8], strides = [1, 1, 1]} : vector<2x8x32xf32> to vector<2x8x8xf32>
    %22 = vector.extract_strided_slice %19 {offsets = [0, 0, 0], sizes = [2, 8, 8], strides = [1, 1, 1]} : vector<2x8x32xf32> to vector<2x8x8xf32>
    "tpu.trace_start"() <{level = 10 : i32, message = "bqd,bkd->bqk"}> : () -> ()
    %cst_9 = arith.constant dense<0.000000e+00> : vector<2x8x8xf32>
    %23 = tpu.matmul %20, %21, %cst_9 {dimension_numbers = #tpu.dot_dimension_numbers<[2], [2], [1], [1], [0, 0, 0, 1, 1, 1], [0], [0]>} : vector<2x8x8xf32>, vector<2x8x8xf32>, vector<2x8x8xf32> -> vector<2x8x8xf32>
    "tpu.trace_stop"() : () -> ()
    %cst_10 = arith.constant 0.353553385 : f32
    %24 = vector.broadcast %cst_10 : f32 to vector<2x8x8xf32>
    %25 = arith.mulf %23, %24 : vector<2x8x8xf32>
    %cst_11 = arith.constant dense<0xFF800000> : vector<2x8xf32>
    %26 = vector.multi_reduction <maximumf>, %25, %cst_11 [2] : vector<2x8x8xf32> to vector<2x8xf32>
    %27 = vector.shape_cast %26 : vector<2x8xf32> to vector<2x8x1xf32>
    %28 = vector.broadcast %27 : vector<2x8x1xf32> to vector<2x8x8xf32>
    %29 = arith.subf %25, %28 : vector<2x8x8xf32>
    %30 = math.exp %29 : vector<2x8x8xf32>
    %cst_12 = arith.constant dense<0.000000e+00> : vector<2x8xf32>
    %31 = vector.multi_reduction <add>, %30, %cst_12 [2] : vector<2x8x8xf32> to vector<2x8xf32>
    %32 = vector.shape_cast %31 : vector<2x8xf32> to vector<2x8x1xf32>
    %33 = tpu.reciprocal %32 {approx = true} : vector<2x8x1xf32> -> vector<2x8x1xf32>
    %34 = vector.broadcast %33 : vector<2x8x1xf32> to vector<2x8x8xf32>
    %35 = arith.mulf %30, %34 : vector<2x8x8xf32>
    "tpu.trace_start"() <{level = 10 : i32, message = "bqk,bkd->bqd"}> : () -> ()
    %cst_13 = arith.constant dense<0.000000e+00> : vector<2x8x8xf32>
    %36 = tpu.matmul %35, %22, %cst_13 {dimension_numbers = #tpu.dot_dimension_numbers<[2], [1], [1], [2], [0, 0, 0, 1, 1, 2], [0], [0]>} : vector<2x8x8xf32>, vector<2x8x8xf32>, vector<2x8x8xf32> -> vector<2x8x8xf32>
    "tpu.trace_stop"() : () -> ()
    %c0_14 = arith.constant 0 : index
    %c0_15 = arith.constant 0 : index
    %c0_16 = arith.constant 0 : index
    %37 = vector.load %arg15[%c0_14, %c0_15, %c0_16] : memref<2x8x32xf32, #tpu.memory_space<vmem>>, vector<2x8x8xf32>
    tpu.vector_store %arg15[%c0_14, %c0_15, %c0_16], %36 {strides = array<i32>} : memref<2x8x32xf32, #tpu.memory_space<vmem>>, vector<2x8x8xf32>,
    %38 = vector.extract_strided_slice %15 {offsets = [0, 0, 8], sizes = [2, 8, 8], strides = [1, 1, 1]} : vector<2x8x32xf32> to vector<2x8x8xf32>
    %39 = vector.extract_strided_slice %17 {offsets = [0, 0, 8], sizes = [2, 8, 8], strides = [1, 1, 1]} : vector<2x8x32xf32> to vector<2x8x8xf32>
    %40 = vector.extract_strided_slice %19 {offsets = [0, 0, 8], sizes = [2, 8, 8], strides = [1, 1, 1]} : vector<2x8x32xf32> to vector<2x8x8xf32>
    "tpu.trace_start"() <{level = 10 : i32, message = "bqd,bkd->bqk"}> : () -> ()
    %cst_17 = arith.constant dense<0.000000e+00> : vector<2x8x8xf32>
    %41 = tpu.matmul %38, %39, %cst_17 {dimension_numbers = #tpu.dot_dimension_numbers<[2], [2], [1], [1], [0, 0, 0, 1, 1, 1], [0], [0]>} : vector<2x8x8xf32>, vector<2x8x8xf32>, vector<2x8x8xf32> -> vector<2x8x8xf32>
    "tpu.trace_stop"() : () -> ()
    %cst_18 = arith.constant 0.353553385 : f32
    %42 = vector.broadcast %cst_18 : f32 to vector<2x8x8xf32>
    %43 = arith.mulf %41, %42 : vector<2x8x8xf32>
    %cst_19 = arith.constant dense<0xFF800000> : vector<2x8xf32>
    %44 = vector.multi_reduction <maximumf>, %43, %cst_19 [2] : vector<2x8x8xf32> to vector<2x8xf32>
    %45 = vector.shape_cast %44 : vector<2x8xf32> to vector<2x8x1xf32>
    %46 = vector.broadcast %45 : vector<2x8x1xf32> to vector<2x8x8xf32>
    %47 = arith.subf %43, %46 : vector<2x8x8xf32>
    %48 = math.exp %47 : vector<2x8x8xf32>
    %cst_20 = arith.constant dense<0.000000e+00> : vector<2x8xf32>
    %49 = vector.multi_reduction <add>, %48, %cst_20 [2] : vector<2x8x8xf32> to vector<2x8xf32>
    %50 = vector.shape_cast %49 : vector<2x8xf32> to vector<2x8x1xf32>
    %51 = tpu.reciprocal %50 {approx = true} : vector<2x8x1xf32> -> vector<2x8x1xf32>
    %52 = vector.broadcast %51 : vector<2x8x1xf32> to vector<2x8x8xf32>
    %53 = arith.mulf %48, %52 : vector<2x8x8xf32>
    "tpu.trace_start"() <{level = 10 : i32, message = "bqk,bkd->bqd"}> : () -> ()
    %cst_21 = arith.constant dense<0.000000e+00> : vector<2x8x8xf32>
    %54 = tpu.matmul %53, %40, %cst_21 {dimension_numbers = #tpu.dot_dimension_numbers<[2], [1], [1], [2], [0, 0, 0, 1, 1, 2], [0], [0]>} : vector<2x8x8xf32>, vector<2x8x8xf32>, vector<2x8x8xf32> -> vector<2x8x8xf32>
    "tpu.trace_stop"() : () -> ()
    %c0_22 = arith.constant 0 : index
    %c0_23 = arith.constant 0 : index
    %c8 = arith.constant 8 : index
    %55 = vector.load %arg15[%c0_22, %c0_23, %c8] : memref<2x8x32xf32, #tpu.memory_space<vmem>>, vector<2x8x8xf32>
    tpu.vector_store %arg15[%c0_22, %c0_23, %c8], %54 {strides = array<i32>} : memref<2x8x32xf32, #tpu.memory_space<vmem>>, vector<2x8x8xf32>,
    %56 = vector.extract_strided_slice %15 {offsets = [0, 0, 16], sizes = [2, 8, 8], strides = [1, 1, 1]} : vector<2x8x32xf32> to vector<2x8x8xf32>
    %57 = vector.extract_strided_slice %17 {offsets = [0, 0, 16], sizes = [2, 8, 8], strides = [1, 1, 1]} : vector<2x8x32xf32> to vector<2x8x8xf32>
    %58 = vector.extract_strided_slice %19 {offsets = [0, 0, 16], sizes = [2, 8, 8], strides = [1, 1, 1]} : vector<2x8x32xf32> to vector<2x8x8xf32>
    "tpu.trace_start"() <{level = 10 : i32, message = "bqd,bkd->bqk"}> : () -> ()
    %cst_24 = arith.constant dense<0.000000e+00> : vector<2x8x8xf32>
    %59 = tpu.matmul %56, %57, %cst_24 {dimension_numbers = #tpu.dot_dimension_numbers<[2], [2], [1], [1], [0, 0, 0, 1, 1, 1], [0], [0]>} : vector<2x8x8xf32>, vector<2x8x8xf32>, vector<2x8x8xf32> -> vector<2x8x8xf32>
    "tpu.trace_stop"() : () -> ()
    %cst_25 = arith.constant 0.353553385 : f32
    %60 = vector.broadcast %cst_25 : f32 to vector<2x8x8xf32>
    %61 = arith.mulf %59, %60 : vector<2x8x8xf32>
    %cst_26 = arith.constant dense<0xFF800000> : vector<2x8xf32>
    %62 = vector.multi_reduction <maximumf>, %61, %cst_26 [2] : vector<2x8x8xf32> to vector<2x8xf32>
    %63 = vector.shape_cast %62 : vector<2x8xf32> to vector<2x8x1xf32>
    %64 = vector.broadcast %63 : vector<2x8x1xf32> to vector<2x8x8xf32>
    %65 = arith.subf %61, %64 : vector<2x8x8xf32>
    %66 = math.exp %65 : vector<2x8x8xf32>
    %cst_27 = arith.constant dense<0.000000e+00> : vector<2x8xf32>
    %67 = vector.multi_reduction <add>, %66, %cst_27 [2] : vector<2x8x8xf32> to vector<2x8xf32>
    %68 = vector.shape_cast %67 : vector<2x8xf32> to vector<2x8x1xf32>
    %69 = tpu.reciprocal %68 {approx = true} : vector<2x8x1xf32> -> vector<2x8x1xf32>
    %70 = vector.broadcast %69 : vector<2x8x1xf32> to vector<2x8x8xf32>
    %71 = arith.mulf %66, %70 : vector<2x8x8xf32>
    "tpu.trace_start"() <{level = 10 : i32, message = "bqk,bkd->bqd"}> : () -> ()
    %cst_28 = arith.constant dense<0.000000e+00> : vector<2x8x8xf32>
    %72 = tpu.matmul %71, %58, %cst_28 {dimension_numbers = #tpu.dot_dimension_numbers<[2], [1], [1], [2], [0, 0, 0, 1, 1, 2], [0], [0]>} : vector<2x8x8xf32>, vector<2x8x8xf32>, vector<2x8x8xf32> -> vector<2x8x8xf32>
    "tpu.trace_stop"() : () -> ()
    %c0_29 = arith.constant 0 : index
    %c0_30 = arith.constant 0 : index
    %c16 = arith.constant 16 : index
    %73 = vector.load %arg15[%c0_29, %c0_30, %c16] : memref<2x8x32xf32, #tpu.memory_space<vmem>>, vector<2x8x8xf32>
    tpu.vector_store %arg15[%c0_29, %c0_30, %c16], %72 {strides = array<i32>} : memref<2x8x32xf32, #tpu.memory_space<vmem>>, vector<2x8x8xf32>,
    %74 = vector.extract_strided_slice %15 {offsets = [0, 0, 24], sizes = [2, 8, 8], strides = [1, 1, 1]} : vector<2x8x32xf32> to vector<2x8x8xf32>
    %75 = vector.extract_strided_slice %17 {offsets = [0, 0, 24], sizes = [2, 8, 8], strides = [1, 1, 1]} : vector<2x8x32xf32> to vector<2x8x8xf32>
    %76 = vector.extract_strided_slice %19 {offsets = [0, 0, 24], sizes = [2, 8, 8], strides = [1, 1, 1]} : vector<2x8x32xf32> to vector<2x8x8xf32>
    "tpu.trace_start"() <{level = 10 : i32, message = "bqd,bkd->bqk"}> : () -> ()
    %cst_31 = arith.constant dense<0.000000e+00> : vector<2x8x8xf32>
    %77 = tpu.matmul %74, %75, %cst_31 {dimension_numbers = #tpu.dot_dimension_numbers<[2], [2], [1], [1], [0, 0, 0, 1, 1, 1], [0], [0]>} : vector<2x8x8xf32>, vector<2x8x8xf32>, vector<2x8x8xf32> -> vector<2x8x8xf32>
    "tpu.trace_stop"() : () -> ()
    %cst_32 = arith.constant 0.353553385 : f32
    %78 = vector.broadcast %cst_32 : f32 to vector<2x8x8xf32>
    %79 = arith.mulf %77, %78 : vector<2x8x8xf32>
    %cst_33 = arith.constant dense<0xFF800000> : vector<2x8xf32>
    %80 = vector.multi_reduction <maximumf>, %79, %cst_33 [2] : vector<2x8x8xf32> to vector<2x8xf32>
    %81 = vector.shape_cast %80 : vector<2x8xf32> to vector<2x8x1xf32>
    %82 = vector.broadcast %81 : vector<2x8x1xf32> to vector<2x8x8xf32>
    %83 = arith.subf %79, %82 : vector<2x8x8xf32>
    %84 = math.exp %83 : vector<2x8x8xf32>
    %cst_34 = arith.constant dense<0.000000e+00> : vector<2x8xf32>
    %85 = vector.multi_reduction <add>, %84, %cst_34 [2] : vector<2x8x8xf32> to vector<2x8xf32>
    %86 = vector.shape_cast %85 : vector<2x8xf32> to vector<2x8x1xf32>
    %87 = tpu.reciprocal %86 {approx = true} : vector<2x8x1xf32> -> vector<2x8x1xf32>
    %88 = vector.broadcast %87 : vector<2x8x1xf32> to vector<2x8x8xf32>
    %89 = arith.mulf %84, %88 : vector<2x8x8xf32>
    "tpu.trace_start"() <{level = 10 : i32, message = "bqk,bkd->bqd"}> : () -> ()
    %cst_35 = arith.constant dense<0.000000e+00> : vector<2x8x8xf32>
    %90 = tpu.matmul %89, %76, %cst_35 {dimension_numbers = #tpu.dot_dimension_numbers<[2], [1], [1], [2], [0, 0, 0, 1, 1, 2], [0], [0]>} : vector<2x8x8xf32>, vector<2x8x8xf32>, vector<2x8x8xf32> -> vector<2x8x8xf32>
    "tpu.trace_stop"() : () -> ()
    %c0_36 = arith.constant 0 : index
    %c0_37 = arith.constant 0 : index
    %c24 = arith.constant 24 : index
    %91 = vector.load %arg15[%c0_36, %c0_37, %c24] : memref<2x8x32xf32, #tpu.memory_space<vmem>>, vector<2x8x8xf32>
    tpu.vector_store %arg15[%c0_36, %c0_37, %c24], %90 {strides = array<i32>} : memref<2x8x32xf32, #tpu.memory_space<vmem>>, vector<2x8x8xf32>,
    %c0_38 = arith.constant 0 : index
    %c0_39 = arith.constant 0 : index
    %c0_40 = arith.constant 0 : index
    %92 = vector.load %arg15[%c0_38, %c0_39, %c0_40] : memref<2x8x32xf32, #tpu.memory_space<vmem>>, vector<2x8x32xf32>
    %93 = vector.shape_cast %92 : vector<2x8x32xf32> to vector<16x32xf32>
    %c0_41 = arith.constant 0 : index
    %c0_42 = arith.constant 0 : index
    %94 = vector.load %arg4[%c0_41, %c0_42] : memref<32x32xf32, #tpu.memory_space<vmem>>, vector<32x32xf32>
    %cst_43 = arith.constant dense<0.000000e+00> : vector<16x32xf32>
    %95 = tpu.matmul %93, %94, %cst_43 {dimension_numbers = #tpu.dot_dimension_numbers<[1], [0], [0], [1], [0, 0, 1, 1], [], []>} : vector<16x32xf32>, vector<32x32xf32>, vector<16x32xf32> -> vector<16x32xf32>
    %c0_44 = arith.constant 0 : index
    %c0_45 = arith.constant 0 : index
    %96 = vector.load %arg5[%c0_44, %c0_45] : memref<1x32xf32, #tpu.memory_space<vmem>>, vector<1x32xf32>
    %97 = vector.broadcast %96 : vector<1x32xf32> to vector<16x32xf32>
    %98 = arith.addf %95, %97 : vector<16x32xf32>
    %cst_46 = arith.constant -1.000000e+02 : f32
    %cst_47 = arith.constant 1.000000e+02 : f32
    %99 = vector.broadcast %cst_46 : f32 to vector<16x32xf32>
    %100 = arith.maximumf %99, %98 : vector<16x32xf32>
    %101 = vector.broadcast %cst_47 : f32 to vector<16x32xf32>
    %102 = arith.minimumf %101, %100 : vector<16x32xf32>
    %103 = arith.addf %8, %102 : vector<16x32xf32>
    %c0_48 = arith.constant 0 : index
    %c0_49 = arith.constant 0 : index
    %104 = vector.load %arg10[%c0_48, %c0_49] : memref<1x32xf32, #tpu.memory_space<vmem>>, vector<1x32xf32>
    %c0_50 = arith.constant 0 : index
    %c0_51 = arith.constant 0 : index
    %105 = vector.load %arg11[%c0_50, %c0_51] : memref<1x32xf32, #tpu.memory_space<vmem>>, vector<1x32xf32>
    %cst_52 = arith.constant dense<0.000000e+00> : vector<16xf32>
    %106 = vector.multi_reduction <add>, %103, %cst_52 [1] : vector<16x32xf32> to vector<16xf32>
    %107 = vector.shape_cast %106 : vector<16xf32> to vector<16x1xf32>
    %cst_53 = arith.constant 3.200000e+01 : f32
    %108 = vector.broadcast %cst_53 : f32 to vector<16x1xf32>
    %109 = arith.divf %107, %108 : vector<16x1xf32>
    %110 = vector.broadcast %109 : vector<16x1xf32> to vector<16x32xf32>
    %111 = arith.subf %103, %110 : vector<16x32xf32>
    %112 = arith.mulf %111, %111 : vector<16x32xf32>
    %cst_54 = arith.constant dense<0.000000e+00> : vector<16xf32>
    %113 = vector.multi_reduction <add>, %112, %cst_54 [1] : vector<16x32xf32> to vector<16xf32>
    %114 = vector.shape_cast %113 : vector<16xf32> to vector<16x1xf32>
    %cst_55 = arith.constant 3.200000e+01 : f32
    %115 = vector.broadcast %cst_55 : f32 to vector<16x1xf32>
    %116 = arith.divf %114, %115 : vector<16x1xf32>
    %cst_56 = arith.constant 9.99999974E-6 : f32
    %117 = vector.broadcast %cst_56 : f32 to vector<16x1xf32>
    %118 = arith.addf %116, %117 : vector<16x1xf32>
    %119 = math.rsqrt %118 : vector<16x1xf32>
    %120 = vector.broadcast %119 : vector<16x1xf32> to vector<16x32xf32>
    %121 = arith.mulf %111, %120 : vector<16x32xf32>
    %122 = vector.broadcast %104 : vector<1x32xf32> to vector<16x32xf32>
    %123 = arith.mulf %121, %122 : vector<16x32xf32>
    %124 = vector.broadcast %105 : vector<1x32xf32> to vector<16x32xf32>
    %125 = arith.addf %123, %124 : vector<16x32xf32>
    %c0_57 = arith.constant 0 : index
    %c0_58 = arith.constant 0 : index
    %126 = vector.load %arg6[%c0_57, %c0_58] : memref<32x64xf32, #tpu.memory_space<vmem>>, vector<32x64xf32>
    %cst_59 = arith.constant dense<0.000000e+00> : vector<16x64xf32>
    %127 = tpu.matmul %125, %126, %cst_59 {dimension_numbers = #tpu.dot_dimension_numbers<[1], [0], [0], [1], [0, 0, 1, 1], [], []>} : vector<16x32xf32>, vector<32x64xf32>, vector<16x64xf32> -> vector<16x64xf32>
    %c0_60 = arith.constant 0 : index
    %c0_61 = arith.constant 0 : index
    %128 = vector.load %arg7[%c0_60, %c0_61] : memref<1x64xf32, #tpu.memory_space<vmem>>, vector<1x64xf32>
    %129 = vector.broadcast %128 : vector<1x64xf32> to vector<16x64xf32>
    %130 = arith.addf %127, %129 : vector<16x64xf32>
    %cst_62 = arith.constant 5.000000e-01 : f32
    %131 = vector.broadcast %cst_62 : f32 to vector<16x64xf32>
    %132 = arith.mulf %131, %130 : vector<16x64xf32>
    %cst_63 = arith.constant 4.471500e-02 : f32
    %133 = vector.broadcast %cst_63 : f32 to vector<16x64xf32>
    %134 = arith.mulf %133, %130 : vector<16x64xf32>
    %135 = arith.mulf %134, %130 : vector<16x64xf32>
    %136 = arith.mulf %135, %130 : vector<16x64xf32>
    %137 = arith.addf %130, %136 : vector<16x64xf32>
    %cst_64 = arith.constant 0.797884583 : f32
    %138 = vector.broadcast %cst_64 : f32 to vector<16x64xf32>
    %139 = arith.mulf %138, %137 : vector<16x64xf32>
    %140 = math.tanh %139 : vector<16x64xf32>
    %cst_65 = arith.constant 1.000000e+00 : f32
    %141 = vector.broadcast %cst_65 : f32 to vector<16x64xf32>
    %142 = arith.addf %141, %140 : vector<16x64xf32>
    %143 = arith.mulf %132, %142 : vector<16x64xf32>
    %c0_66 = arith.constant 0 : index
    %c0_67 = arith.constant 0 : index
    %144 = vector.load %arg8[%c0_66, %c0_67] : memref<64x32xf32, #tpu.memory_space<vmem>>, vector<64x32xf32>
    %cst_68 = arith.constant dense<0.000000e+00> : vector<16x32xf32>
    %145 = tpu.matmul %143, %144, %cst_68 {dimension_numbers = #tpu.dot_dimension_numbers<[1], [0], [0], [1], [0, 0, 1, 1], [], []>} : vector<16x64xf32>, vector<64x32xf32>, vector<16x32xf32> -> vector<16x32xf32>
    %c0_69 = arith.constant 0 : index
    %c0_70 = arith.constant 0 : index
    %146 = vector.load %arg9[%c0_69, %c0_70] : memref<1x32xf32, #tpu.memory_space<vmem>>, vector<1x32xf32>
    %147 = vector.broadcast %146 : vector<1x32xf32> to vector<16x32xf32>
    %148 = arith.addf %145, %147 : vector<16x32xf32>
    %cst_71 = arith.constant -1.000000e+02 : f32
    %cst_72 = arith.constant 1.000000e+02 : f32
    %149 = vector.broadcast %cst_71 : f32 to vector<16x32xf32>
    %150 = arith.maximumf %149, %148 : vector<16x32xf32>
    %151 = vector.broadcast %cst_72 : f32 to vector<16x32xf32>
    %152 = arith.minimumf %151, %150 : vector<16x32xf32>
    %153 = arith.addf %125, %152 : vector<16x32xf32>
    %c0_73 = arith.constant 0 : index
    %c0_74 = arith.constant 0 : index
    %154 = vector.load %arg12[%c0_73, %c0_74] : memref<1x32xf32, #tpu.memory_space<vmem>>, vector<1x32xf32>
    %c0_75 = arith.constant 0 : index
    %c0_76 = arith.constant 0 : index
    %155 = vector.load %arg13[%c0_75, %c0_76] : memref<1x32xf32, #tpu.memory_space<vmem>>, vector<1x32xf32>
    %cst_77 = arith.constant dense<0.000000e+00> : vector<16xf32>
    %156 = vector.multi_reduction <add>, %153, %cst_77 [1] : vector<16x32xf32> to vector<16xf32>
    %157 = vector.shape_cast %156 : vector<16xf32> to vector<16x1xf32>
    %cst_78 = arith.constant 3.200000e+01 : f32
    %158 = vector.broadcast %cst_78 : f32 to vector<16x1xf32>
    %159 = arith.divf %157, %158 : vector<16x1xf32>
    %160 = vector.broadcast %159 : vector<16x1xf32> to vector<16x32xf32>
    %161 = arith.subf %153, %160 : vector<16x32xf32>
    %162 = arith.mulf %161, %161 : vector<16x32xf32>
    %cst_79 = arith.constant dense<0.000000e+00> : vector<16xf32>
    %163 = vector.multi_reduction <add>, %162, %cst_79 [1] : vector<16x32xf32> to vector<16xf32>
    %164 = vector.shape_cast %163 : vector<16xf32> to vector<16x1xf32>
    %cst_80 = arith.constant 3.200000e+01 : f32
    %165 = vector.broadcast %cst_80 : f32 to vector<16x1xf32>
    %166 = arith.divf %164, %165 : vector<16x1xf32>
    %cst_81 = arith.constant 9.99999974E-6 : f32
    %167 = vector.broadcast %cst_81 : f32 to vector<16x1xf32>
    %168 = arith.addf %166, %167 : vector<16x1xf32>
    %169 = math.rsqrt %168 : vector<16x1xf32>
    %170 = vector.broadcast %169 : vector<16x1xf32> to vector<16x32xf32>
    %171 = arith.mulf %161, %170 : vector<16x32xf32>
    %172 = vector.broadcast %154 : vector<1x32xf32> to vector<16x32xf32>
    %173 = arith.mulf %171, %172 : vector<16x32xf32>
    %174 = vector.broadcast %155 : vector<1x32xf32> to vector<16x32xf32>
    %175 = arith.addf %173, %174 : vector<16x32xf32>
    %176 = vector.shape_cast %175 : vector<16x32xf32> to vector<2x8x32xf32>
    %cst_82 = arith.constant dense<0.000000e+00> : vector<2x32xf32>
    %177 = vector.multi_reduction <add>, %176, %cst_82 [1] : vector<2x8x32xf32> to vector<2x32xf32>
    %cst_83 = arith.constant 8.000000e+00 : f32
    %178 = vector.broadcast %cst_83 : f32 to vector<2x32xf32>
    %179 = arith.divf %177, %178 : vector<2x32xf32>
    %180 = arith.cmpf one, %179, %179 : vector<2x32xf32>
    %cst_84 = arith.constant 0.000000e+00 : f32
    %181 = vector.broadcast %cst_84 : f32 to vector<2x32xf32>
    %182 = arith.select %180, %181, %179 : vector<2x32xi1>, vector<2x32xf32>
    %cst_85 = arith.constant -1.000000e+02 : f32
    %cst_86 = arith.constant 1.000000e+02 : f32
    %183 = vector.broadcast %cst_85 : f32 to vector<2x32xf32>
    %184 = arith.maximumf %183, %182 : vector<2x32xf32>
    %185 = vector.broadcast %cst_86 : f32 to vector<2x32xf32>
    %186 = arith.minimumf %185, %184 : vector<2x32xf32>
    %c0_87 = arith.constant 0 : index
    %c0_88 = arith.constant 0 : index
    %187 = vector.load %arg14[%c0_87, %c0_88] : memref<2x32xf32, #tpu.memory_space<vmem>>, vector<2x32xf32>
    tpu.vector_store %arg14[%c0_87, %c0_88], %186 {strides = array<i32>} : memref<2x32xf32, #tpu.memory_space<vmem>>, vector<2x32xf32>,
    return
  }
  func.func @transform_0(%arg0: i32) -> (i32, i32, i32) {
    %c0_i32 = arith.constant 0 : i32
    %c0_i32_0 = arith.constant 0 : i32
    %c0_i32_1 = arith.constant 0 : i32
    return %arg0, %c0_i32, %c0_i32_0 : i32, i32, i32
  }
  func.func @transform_1(%arg0: i32) -> (i32, i32) {
    %c0_i32 = arith.constant 0 : i32
    %c0_i32_0 = arith.constant 0 : i32
    %c0_i32_1 = arith.constant 0 : i32
    return %c0_i32, %c0_i32_0 : i32, i32
  }
  func.func @transform_2(%arg0: i32) -> (i32, i32) {
    %c0_i32 = arith.constant 0 : i32
    %c0_i32_0 = arith.constant 0 : i32
    %c0_i32_1 = arith.constant 0 : i32
    return %c0_i32, %c0_i32_0 : i32, i32
  }
  func.func @transform_3(%arg0: i32) -> (i32, i32) {
    %c0_i32 = arith.constant 0 : i32
    %c0_i32_0 = arith.constant 0 : i32
    %c0_i32_1 = arith.constant 0 : i32
    return %c0_i32, %c0_i32_0 : i32, i32
  }
  func.func @transform_4(%arg0: i32) -> (i32, i32) {
    %c0_i32 = arith.constant 0 : i32
    %c0_i32_0 = arith.constant 0 : i32
    %c0_i32_1 = arith.constant 0 : i32
    return %c0_i32, %c0_i32_0 : i32, i32
  }
  func.func @transform_5(%arg0: i32) -> (i32, i32) {
    %c0_i32 = arith.constant 0 : i32
    %c0_i32_0 = arith.constant 0 : i32
    %c0_i32_1 = arith.constant 0 : i32
    return %c0_i32, %c0_i32_0 : i32, i32
  }
  func.func @transform_6(%arg0: i32) -> (i32, i32) {
    %c0_i32 = arith.constant 0 : i32
    %c0_i32_0 = arith.constant 0 : i32
    %c0_i32_1 = arith.constant 0 : i32
    return %c0_i32, %c0_i32_0 : i32, i32
  }
  func.func @transform_7(%arg0: i32) -> (i32, i32) {
    %c0_i32 = arith.constant 0 : i32
    %c0_i32_0 = arith.constant 0 : i32
    %c0_i32_1 = arith.constant 0 : i32
    return %c0_i32, %c0_i32_0 : i32, i32
  }
  func.func @transform_8(%arg0: i32) -> (i32, i32) {
    %c0_i32 = arith.constant 0 : i32
    %c0_i32_0 = arith.constant 0 : i32
    %c0_i32_1 = arith.constant 0 : i32
    return %c0_i32, %c0_i32_0 : i32, i32
  }
  func.func @transform_9(%arg0: i32) -> (i32, i32) {
    %c0_i32 = arith.constant 0 : i32
    %c0_i32_0 = arith.constant 0 : i32
    %c0_i32_1 = arith.constant 0 : i32
    return %c0_i32, %c0_i32_0 : i32, i32
  }
  func.func @transform_10(%arg0: i32) -> (i32, i32) {
    %c0_i32 = arith.constant 0 : i32
    %c0_i32_0 = arith.constant 0 : i32
    %c0_i32_1 = arith.constant 0 : i32
    return %c0_i32, %c0_i32_0 : i32, i32
  }
  func.func @transform_11(%arg0: i32) -> (i32, i32) {
    %c0_i32 = arith.constant 0 : i32
    %c0_i32_0 = arith.constant 0 : i32
    %c0_i32_1 = arith.constant 0 : i32
    return %c0_i32, %c0_i32_0 : i32, i32
  }
  func.func @transform_12(%arg0: i32) -> (i32, i32) {
    %c0_i32 = arith.constant 0 : i32
    %c0_i32_0 = arith.constant 0 : i32
    %c0_i32_1 = arith.constant 0 : i32
    return %c0_i32, %c0_i32_0 : i32, i32
  }
  func.func @transform_13(%arg0: i32) -> (i32, i32) {
    %c0_i32 = arith.constant 0 : i32
    %c0_i32_0 = arith.constant 0 : i32
    return %arg0, %c0_i32 : i32, i32
  }
}

</mosaic_0001>

<llo_original>
// kernel: tpu_custom_call.1
$region0: #{tpu_custom_call.1}
  #allocation0 [shape = 'u32[]', space=smem, size = 0x4, offset = 0x4, fixed_abs, tag = 'smem constant byte address 0x4 - core index']
  #allocation1 [shape = 'u32[144,128]{1,0:T(1,128)}', space=vmem, size = 0x12000, scoped, tag = 'internal scratch']
  #allocation2 [shape = 'f32[2,8,32]{2,1,0:T(8,128)}', space=vmem, size = 0x2000, scoped, tag = 'scratch operand']
  %s0 = inlined_call_operand.hbm [shape: f32[2,8,32], index: 0, kind: input, shape index: {}]
  %s1 = inlined_call_operand.vmem [shape: f32[32,96], index: 1, kind: input, shape index: {}]
  %s2 = inlined_call_operand.vmem [shape: f32[1,96], index: 2, kind: input, shape index: {}]
  %s3 = inlined_call_operand.vmem [shape: f32[32,32], index: 3, kind: input, shape index: {}]
  %s4 = inlined_call_operand.vmem [shape: f32[1,32], index: 4, kind: input, shape index: {}]
  %s5 = inlined_call_operand.vmem [shape: f32[32,64], index: 5, kind: input, shape index: {}]
  %s6 = inlined_call_operand.vmem [shape: f32[1,64], index: 6, kind: input, shape index: {}]
  %s7 = inlined_call_operand.vmem [shape: f32[64,32], index: 7, kind: input, shape index: {}]
  %s8 = inlined_call_operand.vmem [shape: f32[1,32], index: 8, kind: input, shape index: {}]
  %s9 = inlined_call_operand.vmem [shape: f32[1,32], index: 9, kind: input, shape index: {}]
  %s10 = inlined_call_operand.vmem [shape: f32[1,32], index: 10, kind: input, shape index: {}]
  %s11 = inlined_call_operand.vmem [shape: f32[1,32], index: 11, kind: input, shape index: {}]
  %s12 = inlined_call_operand.vmem [shape: f32[1,32], index: 12, kind: input, shape index: {}]
  %s13 = inlined_call_operand.hbm [shape: f32[2,32], index: 13, kind: output, shape index: {}]
  %s14 = sld [smem:[#allocation0]]
  $region66: #{tpu_custom_call.1} parent=0
    _
  %s16 = ssub.s32 1, %s14
  %s17 = scalar_select 0, %s16, %s14
  $region1: #{tpu_custom_call.1} parent=0
    #allocation3 [shape = 'u8[8192]{0}', space=vmem, size = 0x2000, scoped, tag = 'input window, operand 0, single buffered']
    #allocation4 [shape = 's32[1]{0}', space=sflag, size = 0x4, scoped, tag = 'scoped memory for tpu_custom_call.1']
    #allocation5 [shape = 's32[1]{0}', space=sflag, size = 0x4, scoped, tag = 'scoped memory for tpu_custom_call.1']
    #allocation6 [shape = 'u8[1024]{0}', space=vmem, size = 0x400, scoped, tag = 'output window, operand 0, single buffered']
    %18 = vsyncpa [#allocation4], 0
    %19 = vsyncpa [#allocation5], 0
    // Predicated region
    $region2: #{tpu_custom_call.1} parent=1 // pred_check
      _
    $region3: #{tpu_custom_call.1} parent=1 // pred_check_branch
      %21 = sbr.rel (0) target = $region5
    $region4: #{tpu_custom_call.1} parent=1 // pred_region
      %s23 = ssub.s32 256, 256
      %24 = vsyncadd [#allocation4], %s23
      %s25 = sshll.u32 [#allocation3], 4
      %s26 = int_to_ptr.vmem [resolvable:$true] %s25
      %31 = dma.hbm_to_vmem [thread:$0]  %s0, 256, %s26, [#allocation4], 128, 128, 8
    $region5: #{tpu_custom_call.1} parent=1 // pred_fallthru
      _
    // Predicated region
    $region6: #{tpu_custom_call.1} parent=1 // pred_check
      _
    $region7: #{tpu_custom_call.1} parent=1 // pred_check_branch
      %33 = sbr.rel (0) target = $region9
    $region8: #{tpu_custom_call.1} parent=1 // pred_region
      _
    $region9: #{tpu_custom_call.1} parent=1 // pred_fallthru
      _
    // Predicated region
    $region10: #{tpu_custom_call.1} parent=1 // pred_check
      _
    $region11: #{tpu_custom_call.1} parent=1 // pred_check_branch
      %35 = sbr.rel (0) target = $region13
    $region12: #{tpu_custom_call.1} parent=1 // pred_region
      _
    $region13: #{tpu_custom_call.1} parent=1 // pred_fallthru
      _
    // Predicated region
    $region14: #{tpu_custom_call.1} parent=1 // pred_check
      _
    $region15: #{tpu_custom_call.1} parent=1 // pred_check_branch
      %37 = sbr.rel (0) target = $region17
    $region16: #{tpu_custom_call.1} parent=1 // pred_region
      _
    $region17: #{tpu_custom_call.1} parent=1 // pred_fallthru
      _
    // Predicated region
    $region18: #{tpu_custom_call.1} parent=1 // pred_check
      _
    $region19: #{tpu_custom_call.1} parent=1 // pred_check_branch
      %39 = sbr.rel (0) target = $region21
    $region20: #{tpu_custom_call.1} parent=1 // pred_region
      _
    $region21: #{tpu_custom_call.1} parent=1 // pred_fallthru
      _
    // Predicated region
    $region22: #{tpu_custom_call.1} parent=1 // pred_check
      _
    $region23: #{tpu_custom_call.1} parent=1 // pred_check_branch
      %41 = sbr.rel (0) target = $region25
    $region24: #{tpu_custom_call.1} parent=1 // pred_region
      _
    $region25: #{tpu_custom_call.1} parent=1 // pred_fallthru
      _
    // Predicated region
    $region26: #{tpu_custom_call.1} parent=1 // pred_check
      _
    $region27: #{tpu_custom_call.1} parent=1 // pred_check_branch
      %43 = sbr.rel (0) target = $region29
    $region28: #{tpu_custom_call.1} parent=1 // pred_region
      _
    $region29: #{tpu_custom_call.1} parent=1 // pred_fallthru
      _
    // Predicated region
    $region30: #{tpu_custom_call.1} parent=1 // pred_check
      _
    $region31: #{tpu_custom_call.1} parent=1 // pred_check_branch
      %45 = sbr.rel (0) target = $region33
    $region32: #{tpu_custom_call.1} parent=1 // pred_region
      _
    $region33: #{tpu_custom_call.1} parent=1 // pred_fallthru
      _
    // Predicated region
    $region34: #{tpu_custom_call.1} parent=1 // pred_check
      _
    $region35: #{tpu_custom_call.1} parent=1 // pred_check_branch
      %47 = sbr.rel (0) target = $region37
    $region36: #{tpu_custom_call.1} parent=1 // pred_region
      _
    $region37: #{tpu_custom_call.1} parent=1 // pred_fallthru
      _
    // Predicated region
    $region38: #{tpu_custom_call.1} parent=1 // pred_check
      _
    $region39: #{tpu_custom_call.1} parent=1 // pred_check_branch
      %49 = sbr.rel (0) target = $region41
    $region40: #{tpu_custom_call.1} parent=1 // pred_region
      _
    $region41: #{tpu_custom_call.1} parent=1 // pred_fallthru
      _
    // Predicated region
    $region42: #{tpu_custom_call.1} parent=1 // pred_check
      _
    $region43: #{tpu_custom_call.1} parent=1 // pred_check_branch
      %51 = sbr.rel (0) target = $region45
    $region44: #{tpu_custom_call.1} parent=1 // pred_region
      _
    $region45: #{tpu_custom_call.1} parent=1 // pred_fallthru
      _
    // Predicated region
    $region46: #{tpu_custom_call.1} parent=1 // pred_check
      _
    $region47: #{tpu_custom_call.1} parent=1 // pred_check_branch
      %53 = sbr.rel (0) target = $region49
    $region48: #{tpu_custom_call.1} parent=1 // pred_region
      _
    $region49: #{tpu_custom_call.1} parent=1 // pred_fallthru
      _
    // Predicated region
    $region50: #{tpu_custom_call.1} parent=1 // pred_check
      _
    $region51: #{tpu_custom_call.1} parent=1 // pred_check_branch
      %55 = sbr.rel (0) target = $region53
    $region52: #{tpu_custom_call.1} parent=1 // pred_region
      _
    $region53: #{tpu_custom_call.1} parent=1 // pred_fallthru
      _
    // Predicated region
    $region54: #{tpu_custom_call.1} parent=1 // pred_check
      _
    $region55: #{tpu_custom_call.1} parent=1 // pred_check_branch
      %57 = sbr.rel (0) target = $region57
    $region56: #{tpu_custom_call.1} parent=1 // pred_region
      %58 = dma.done [#allocation4], 256
    $region57: #{tpu_custom_call.1} parent=1 // pred_fallthru
      _
    %v59 = vld [vmem:[#allocation3] sm:$0xff]
    %v60 = vld [vmem:[#allocation3 + $0x8] sm:$0xff]
    %vm61 = vcmp.ne.f32.partialorder %v59, %v59
    %vm62 = vcmp.ne.f32.partialorder %v60, %v60
    %v63 = vsel %vm61, 0.0, %v59
    %v64 = vsel %vm62, 0.0, %v60
    %v65 = vmax.f32 %v63, -100.0
    %v66 = vmax.f32 %v64, -100.0
    %v67 = vmin.f32 %v65, 100.0
    %v68 = vmin.f32 %v66, 100.0
    %v69 = vld [vmem:[%s1] sm:$0xff]
    %v70 = vld [vmem:[%s1 + $0x8] sm:$0xff]
    %v71 = vld [vmem:[%s1 + $0x10] sm:$0xff]
    %v72 = vld [vmem:[%s1 + $0x18] sm:$0xff]
    %v73 = vld [vmem:[%s2] sm:$0x1]
    %v75 = vlaneseq
    %v76 = vshrl.u32 %v75, 7
    %v77 = vsub.s32 0, %v76
    %v78 = vrot.slane %v73, %v77
    %vm80 = vcmask 261120
    %v82 = vsel %vm80, %v67, 0
    %v85 = vsel %vm80, %v68, 0
    %87 = vmatprep.subr.mxu0 0.0
    %88 = vmatpush1.msra.mxu0 0.0
    %89 = vmatprep.subr.mxu0 0.0
    %90 = vmatpush1.msra.mxu0 0.0
    %91 = vmatprep.subr.mxu0 0.0
    %92 = vmatpush1.msra.mxu0 0.0
    %93 = vmatprep.subr.mxu0 0.0
    %94 = vmatpush1.msra.mxu0 0.0
    %95 = vmatprep.subr.mxu0 0.0
    %96 = vmatpush1.msra.mxu0 0.0
    %97 = vmatprep.subr.mxu0 0.0
    %98 = vmatpush1.msra.mxu0 0.0
    %99 = vmatprep.subr.mxu0 0.0
    %100 = vmatpush1.msra.mxu0 0.0
    %101 = vmatprep.subr.mxu0 0.0
    %102 = vmatpush1.msra.mxu0 0.0
    %103 = vmatprep.subr.mxu0 0.0
    %104 = vmatpush1.msra.mxu0 0.0
    %105 = vmatprep.subr.mxu0 0.0
    %106 = vmatpush1.msra.mxu0 0.0
    %107 = vmatprep.subr.mxu0 0.0
    %108 = vmatpush1.msra.mxu0 0.0
    %109 = vmatprep.subr.mxu0 0.0
    %110 = vmatpush1.msra.mxu0 0.0
    %111 = vmatprep.subr.mxu0 0.0
    %112 = vmatpush1.msra.mxu0 %v72
    %113 = vmatprep.subr.mxu0 0.0
    %114 = vmatpush1.msra.mxu0 %v71
    %115 = vmatprep.subr.mxu0 0.0
    %116 = vmatpush1.msra.mxu0 %v70
    %117 = vmatprep.subr.mxu0 0.0
    %118 = vmatpush1.msra.mxu0 %v69
    %119 = vmatprep.subr.mxu0 0.0
    %120 = vmatpush2.msra.mxu0 0.0
    %121 = vmatprep.subr.mxu0 0.0
    %122 = vmatpush2.msra.mxu0 0.0
    %123 = vmatprep.subr.mxu0 0.0
    %124 = vmatpush2.msra.mxu0 0.0
    %125 = vmatprep.subr.mxu0 0.0
    %126 = vmatpush2.msra.mxu0 0.0
    %127 = vmatprep.subr.mxu0 0.0
    %128 = vmatpush2.msra.mxu0 0.0
    %129 = vmatprep.subr.mxu0 0.0
    %130 = vmatpush2.msra.mxu0 0.0
    %131 = vmatprep.subr.mxu0 0.0
    %132 = vmatpush2.msra.mxu0 0.0
    %133 = vmatprep.subr.mxu0 0.0
    %134 = vmatpush2.msra.mxu0 0.0
    %135 = vmatprep.subr.mxu0 0.0
    %136 = vmatpush2.msra.mxu0 0.0
    %137 = vmatprep.subr.mxu0 0.0
    %138 = vmatpush2.msra.mxu0 0.0
    %139 = vmatprep.subr.mxu0 0.0
    %140 = vmatpush2.msra.mxu0 0.0
    %141 = vmatprep.subr.mxu0 0.0
    %142 = vmatpush2.msra.mxu0 0.0
    %143 = vmatprep.subr.mxu0 0.0
    %144 = vmatpush2.msra.mxu0 0.0
    %145 = vmatprep.subr.mxu0 0.0
    %146 = vmatpush2.msra.mxu0 0.0
    %147 = vmatprep.subr.mxu0 0.0
    %148 = vmatpush2.msra.mxu0 0.0
    %149 = vmatprep.subr.mxu0 0.0
    %150 = vmatpush2.msra.mxu0 0.0
    %151 = vmatprep.mubr.f32.mxu0 0.0
    %152 = vmatmul.mubr.f32.gmra.mxu0 %v82
    %v153 = vpop.f32.mrf.mxu0
    %v154 = vadd.f32 %v78, %v153
    %v155 = vpop.f32.mrf.mxu0
    %156 = vmatprep.mubr.f32.mxu0 0.0
    %157 = vmatmul.mubr.f32.gmra.mxu0 %v85
    %v158 = vpop.f32.mrf.mxu0
    %v159 = vadd.f32 %v78, %v158
    %v160 = vpop.f32.mrf.mxu0
    %161 = vdwg.mxu0
    %163 = vrot.lane.b32.xlu0 %v154, 96
    %v164 = vpop.permute.xlu0 %163
    %vm165 = vcmask 64512
    %v166 = vsel %vm165, %v154, 0
    %v168 = vsel %vm165, %v164, 0
    %170 = vmatprep.subr.mxu0 0.0
    %171 = vmatpush1.xpose.msra.mxu0 0.0
    %172 = vmatprep.subr.mxu0 0.0
    %173 = vmatpush1.xpose.msra.mxu0 0.0
    %174 = vmatprep.subr.mxu0 0.0
    %175 = vmatpush1.xpose.msra.mxu0 0.0
    %176 = vmatprep.subr.mxu0 0.0
    %177 = vmatpush1.xpose.msra.mxu0 0.0
    %178 = vmatprep.subr.mxu0 0.0
    %179 = vmatpush1.xpose.msra.mxu0 0.0
    %180 = vmatprep.subr.mxu0 0.0
    %181 = vmatpush1.xpose.msra.mxu0 0.0
    %182 = vmatprep.subr.mxu0 0.0
    %183 = vmatpush1.xpose.msra.mxu0 0.0
    %184 = vmatprep.subr.mxu0 0.0
    %185 = vmatpush1.xpose.msra.mxu0 0.0
    %186 = vmatprep.subr.mxu0 0.0
    %187 = vmatpush1.xpose.msra.mxu0 0.0
    %188 = vmatprep.subr.mxu0 0.0
    %189 = vmatpush1.xpose.msra.mxu0 0.0
    %190 = vmatprep.subr.mxu0 0.0
    %191 = vmatpush1.xpose.msra.mxu0 0.0
    %192 = vmatprep.subr.mxu0 0.0
    %193 = vmatpush1.xpose.msra.mxu0 0.0
    %194 = vmatprep.subr.mxu0 0.0
    %195 = vmatpush1.xpose.msra.mxu0 0.0
    %196 = vmatprep.subr.mxu0 0.0
    %197 = vmatpush1.xpose.msra.mxu0 0.0
    %198 = vmatprep.subr.mxu0 0.0
    %199 = vmatpush1.xpose.msra.mxu0 0.0
    %200 = vmatprep.subr.mxu0 0.0
    %201 = vmatpush1.xpose.msra.mxu0 %v168
    %202 = vmatprep.subr.mxu0 0.0
    %203 = vmatpush2.xpose.msra.mxu0 0.0
    %204 = vmatprep.subr.mxu0 0.0
    %205 = vmatpush2.xpose.msra.mxu0 0.0
    %206 = vmatprep.subr.mxu0 0.0
    %207 = vmatpush2.xpose.msra.mxu0 0.0
    %208 = vmatprep.subr.mxu0 0.0
    %209 = vmatpush2.xpose.msra.mxu0 0.0
    %210 = vmatprep.subr.mxu0 0.0
    %211 = vmatpush2.xpose.msra.mxu0 0.0
    %212 = vmatprep.subr.mxu0 0.0
    %213 = vmatpush2.xpose.msra.mxu0 0.0
    %214 = vmatprep.subr.mxu0 0.0
    %215 = vmatpush2.xpose.msra.mxu0 0.0
    %216 = vmatprep.subr.mxu0 0.0
    %217 = vmatpush2.xpose.msra.mxu0 0.0
    %218 = vmatprep.subr.mxu0 0.0
    %219 = vmatpush2.xpose.msra.mxu0 0.0
    %220 = vmatprep.subr.mxu0 0.0
    %221 = vmatpush2.xpose.msra.mxu0 0.0
    %222 = vmatprep.subr.mxu0 0.0
    %223 = vmatpush2.xpose.msra.mxu0 0.0
    %224 = vmatprep.subr.mxu0 0.0
    %225 = vmatpush2.xpose.msra.mxu0 0.0
    %226 = vmatprep.subr.mxu0 0.0
    %227 = vmatpush2.xpose.msra.mxu0 0.0
    %228 = vmatprep.subr.mxu0 0.0
    %229 = vmatpush2.xpose.msra.mxu0 0.0
    %230 = vmatprep.subr.mxu0 0.0
    %231 = vmatpush2.xpose.msra.mxu0 0.0
    %232 = vmatprep.subr.mxu0 0.0
    %233 = vmatpush2.xpose.msra.mxu0 0.0
    %234 = vmatprep.mubr.f32.mxu0 0.0
    %235 = vmatmul.mubr.f32.gmra.mxu0 %v166
    %v236 = vpop.f32.mrf.mxu0
    %v237 = vadd.f32 0.0, %v236
    %v238 = vpop.f32.mrf.mxu0
    %239 = vdwg.mxu0
    %241 = vrot.lane.b32.xlu0 %v159, 96
    %v242 = vpop.permute.xlu0 %241
    %v243 = vsel %vm165, %v159, 0
    %v245 = vsel %vm165, %v242, 0
    %247 = vmatprep.subr.mxu0 0.0
    %248 = vmatpush1.xpose.msra.mxu0 0.0
    %249 = vmatprep.subr.mxu0 0.0
    %250 = vmatpush1.xpose.msra.mxu0 0.0
    %251 = vmatprep.subr.mxu0 0.0
    %252 = vmatpush1.xpose.msra.mxu0 0.0
    %253 = vmatprep.subr.mxu0 0.0
    %254 = vmatpush1.xpose.msra.mxu0 0.0
    %255 = vmatprep.subr.mxu0 0.0
    %256 = vmatpush1.xpose.msra.mxu0 0.0
    %257 = vmatprep.subr.mxu0 0.0
    %258 = vmatpush1.xpose.msra.mxu0 0.0
    %259 = vmatprep.subr.mxu0 0.0
    %260 = vmatpush1.xpose.msra.mxu0 0.0
    %261 = vmatprep.subr.mxu0 0.0
    %262 = vmatpush1.xpose.msra.mxu0 0.0
    %263 = vmatprep.subr.mxu0 0.0
    %264 = vmatpush1.xpose.msra.mxu0 0.0
    %265 = vmatprep.subr.mxu0 0.0
    %266 = vmatpush1.xpose.msra.mxu0 0.0
    %267 = vmatprep.subr.mxu0 0.0
    %268 = vmatpush1.xpose.msra.mxu0 0.0
    %269 = vmatprep.subr.mxu0 0.0
    %270 = vmatpush1.xpose.msra.mxu0 0.0
    %271 = vmatprep.subr.mxu0 0.0
    %272 = vmatpush1.xpose.msra.mxu0 0.0
    %273 = vmatprep.subr.mxu0 0.0
    %274 = vmatpush1.xpose.msra.mxu0 0.0
    %275 = vmatprep.subr.mxu0 0.0
    %276 = vmatpush1.xpose.msra.mxu0 0.0
    %277 = vmatprep.subr.mxu0 0.0
    %278 = vmatpush1.xpose.msra.mxu0 %v245
    %279 = vmatprep.subr.mxu0 0.0
    %280 = vmatpush2.xpose.msra.mxu0 0.0
    %281 = vmatprep.subr.mxu0 0.0
    %282 = vmatpush2.xpose.msra.mxu0 0.0
    %283 = vmatprep.subr.mxu0 0.0
    %284 = vmatpush2.xpose.msra.mxu0 0.0
    %285 = vmatprep.subr.mxu0 0.0
    %286 = vmatpush2.xpose.msra.mxu0 0.0
    %287 = vmatprep.subr.mxu0 0.0
    %288 = vmatpush2.xpose.msra.mxu0 0.0
    %289 = vmatprep.subr.mxu0 0.0
    %290 = vmatpush2.xpose.msra.mxu0 0.0
    %291 = vmatprep.subr.mxu0 0.0
    %292 = vmatpush2.xpose.msra.mxu0 0.0
    %293 = vmatprep.subr.mxu0 0.0
    %294 = vmatpush2.xpose.msra.mxu0 0.0
    %295 = vmatprep.subr.mxu0 0.0
    %296 = vmatpush2.xpose.msra.mxu0 0.0
    %297 = vmatprep.subr.mxu0 0.0
    %298 = vmatpush2.xpose.msra.mxu0 0.0
    %299 = vmatprep.subr.mxu0 0.0
    %300 = vmatpush2.xpose.msra.mxu0 0.0
    %301 = vmatprep.subr.mxu0 0.0
    %302 = vmatpush2.xpose.msra.mxu0 0.0
    %303 = vmatprep.subr.mxu0 0.0
    %304 = vmatpush2.xpose.msra.mxu0 0.0
    %305 = vmatprep.subr.mxu0 0.0
    %306 = vmatpush2.xpose.msra.mxu0 0.0
    %307 = vmatprep.subr.mxu0 0.0
    %308 = vmatpush2.xpose.msra.mxu0 0.0
    %309 = vmatprep.subr.mxu0 0.0
    %310 = vmatpush2.xpose.msra.mxu0 0.0
    %311 = vmatprep.mubr.f32.mxu0 0.0
    %312 = vmatmul.mubr.f32.gmra.mxu0 %v243
    %v313 = vpop.f32.mrf.mxu0
    %v314 = vadd.f32 0.0, %v313
    %v315 = vpop.f32.mrf.mxu0
    %316 = vdwg.mxu0
    %v317 = vmul.f32 %v237, 0.35355338
    %v318 = vmul.f32 %v314, 0.35355338
    %v319 = vsel %vm165, %v317, -inf
    %320 = vmax.xlane.f32.xlu0 %v319
    %v321 = vpop.xlane.xlu0 %320
    %v322 = vsel %vm165, %v318, -inf
    %323 = vmax.xlane.f32.xlu0 %v322
    %v324 = vpop.xlane.xlu0 %323
    %v325 = vsub.f32 %v317, %v321
    %v326 = vsub.f32 %v318, %v324
    %v327 = vmul.f32 %v325, 1.442695
    %v328 = vpow.pop %v327
    %v329 = vmul.f32 %v326, 1.442695
    %v330 = vpow.pop %v329
    %v331 = vsel %vm165, %v328, 0.0
    %332 = vadd.xlane.f32.xlu0 %v331
    %v333 = vpop.xlane.xlu0 %332
    %v334 = vsel %vm165, %v330, 0.0
    %335 = vadd.xlane.f32.xlu0 %v334
    %v336 = vpop.xlane.xlu0 %335
    %v337 = vrcp.pop %v333
    %v338 = vrcp.pop %v336
    %v339 = vmul.f32 %v328, %v337
    %v340 = vmul.f32 %v330, %v338
    %341 = vrot.lane.b32.xlu0 %v154, 64
    %v342 = vpop.permute.xlu0 %341
    %v345 = vsel %vm165, %v339, 0
    %347 = vmatprep.subr.mxu0 0.0
    %348 = vmatpush1.msra.mxu0 0.0
    %349 = vmatprep.subr.mxu0 0.0
    %350 = vmatpush1.msra.mxu0 0.0
    %351 = vmatprep.subr.mxu0 0.0
    %352 = vmatpush1.msra.mxu0 0.0
    %353 = vmatprep.subr.mxu0 0.0
    %354 = vmatpush1.msra.mxu0 0.0
    %355 = vmatprep.subr.mxu0 0.0
    %356 = vmatpush1.msra.mxu0 0.0
    %357 = vmatprep.subr.mxu0 0.0
    %358 = vmatpush1.msra.mxu0 0.0
    %359 = vmatprep.subr.mxu0 0.0
    %360 = vmatpush1.msra.mxu0 0.0
    %361 = vmatprep.subr.mxu0 0.0
    %362 = vmatpush1.msra.mxu0 0.0
    %363 = vmatprep.subr.mxu0 0.0
    %364 = vmatpush1.msra.mxu0 0.0
    %365 = vmatprep.subr.mxu0 0.0
    %366 = vmatpush1.msra.mxu0 0.0
    %367 = vmatprep.subr.mxu0 0.0
    %368 = vmatpush1.msra.mxu0 0.0
    %369 = vmatprep.subr.mxu0 0.0
    %370 = vmatpush1.msra.mxu0 0.0
    %371 = vmatprep.subr.mxu0 0.0
    %372 = vmatpush1.msra.mxu0 0.0
    %373 = vmatprep.subr.mxu0 0.0
    %374 = vmatpush1.msra.mxu0 0.0
    %375 = vmatprep.subr.mxu0 0.0
    %376 = vmatpush1.msra.mxu0 0.0
    %377 = vmatprep.subr.mxu0 0.0
    %378 = vmatpush1.msra.mxu0 %v342
    %379 = vmatprep.subr.mxu0 0.0
    %380 = vmatpush2.msra.mxu0 0.0
    %381 = vmatprep.subr.mxu0 0.0
    %382 = vmatpush2.msra.mxu0 0.0
    %383 = vmatprep.subr.mxu0 0.0
    %384 = vmatpush2.msra.mxu0 0.0
    %385 = vmatprep.subr.mxu0 0.0
    %386 = vmatpush2.msra.mxu0 0.0
    %387 = vmatprep.subr.mxu0 0.0
    %388 = vmatpush2.msra.mxu0 0.0
    %389 = vmatprep.subr.mxu0 0.0
    %390 = vmatpush2.msra.mxu0 0.0
    %391 = vmatprep.subr.mxu0 0.0
    %392 = vmatpush2.msra.mxu0 0.0
    %393 = vmatprep.subr.mxu0 0.0
    %394 = vmatpush2.msra.mxu0 0.0
    %395 = vmatprep.subr.mxu0 0.0
    %396 = vmatpush2.msra.mxu0 0.0
    %397 = vmatprep.subr.mxu0 0.0
    %398 = vmatpush2.msra.mxu0 0.0
    %399 = vmatprep.subr.mxu0 0.0
    %400 = vmatpush2.msra.mxu0 0.0
    %401 = vmatprep.subr.mxu0 0.0
    %402 = vmatpush2.msra.mxu0 0.0
    %403 = vmatprep.subr.mxu0 0.0
    %404 = vmatpush2.msra.mxu0 0.0
    %405 = vmatprep.subr.mxu0 0.0
    %406 = vmatpush2.msra.mxu0 0.0
    %407 = vmatprep.subr.mxu0 0.0
    %408 = vmatpush2.msra.mxu0 0.0
    %409 = vmatprep.subr.mxu0 0.0
    %410 = vmatpush2.msra.mxu0 0.0
    %411 = vmatprep.mubr.f32.mxu0 0.0
    %412 = vmatmul.mubr.f32.gmra.mxu0 %v345
    %v413 = vpop.f32.mrf.mxu0
    %v414 = vadd.f32 0.0, %v413
    %v415 = vpop.f32.mrf.mxu0
    %416 = vdwg.mxu0
    %417 = vrot.lane.b32.xlu0 %v159, 64
    %v418 = vpop.permute.xlu0 %417
    %v421 = vsel %vm165, %v340, 0
    %423 = vmatprep.subr.mxu0 0.0
    %424 = vmatpush1.msra.mxu0 0.0
    %425 = vmatprep.subr.mxu0 0.0
    %426 = vmatpush1.msra.mxu0 0.0
    %427 = vmatprep.subr.mxu0 0.0
    %428 = vmatpush1.msra.mxu0 0.0
    %429 = vmatprep.subr.mxu0 0.0
    %430 = vmatpush1.msra.mxu0 0.0
    %431 = vmatprep.subr.mxu0 0.0
    %432 = vmatpush1.msra.mxu0 0.0
    %433 = vmatprep.subr.mxu0 0.0
    %434 = vmatpush1.msra.mxu0 0.0
    %435 = vmatprep.subr.mxu0 0.0
    %436 = vmatpush1.msra.mxu0 0.0
    %437 = vmatprep.subr.mxu0 0.0
    %438 = vmatpush1.msra.mxu0 0.0
    %439 = vmatprep.subr.mxu0 0.0
    %440 = vmatpush1.msra.mxu0 0.0
    %441 = vmatprep.subr.mxu0 0.0
    %442 = vmatpush1.msra.mxu0 0.0
    %443 = vmatprep.subr.mxu0 0.0
    %444 = vmatpush1.msra.mxu0 0.0
    %445 = vmatprep.subr.mxu0 0.0
    %446 = vmatpush1.msra.mxu0 0.0
    %447 = vmatprep.subr.mxu0 0.0
    %448 = vmatpush1.msra.mxu0 0.0
    %449 = vmatprep.subr.mxu0 0.0
    %450 = vmatpush1.msra.mxu0 0.0
    %451 = vmatprep.subr.mxu0 0.0
    %452 = vmatpush1.msra.mxu0 0.0
    %453 = vmatprep.subr.mxu0 0.0
    %454 = vmatpush1.msra.mxu0 %v418
    %455 = vmatprep.subr.mxu0 0.0
    %456 = vmatpush2.msra.mxu0 0.0
    %457 = vmatprep.subr.mxu0 0.0
    %458 = vmatpush2.msra.mxu0 0.0
    %459 = vmatprep.subr.mxu0 0.0
    %460 = vmatpush2.msra.mxu0 0.0
    %461 = vmatprep.subr.mxu0 0.0
    %462 = vmatpush2.msra.mxu0 0.0
    %463 = vmatprep.subr.mxu0 0.0
    %464 = vmatpush2.msra.mxu0 0.0
    %465 = vmatprep.subr.mxu0 0.0
    %466 = vmatpush2.msra.mxu0 0.0
    %467 = vmatprep.subr.mxu0 0.0
    %468 = vmatpush2.msra.mxu0 0.0
    %469 = vmatprep.subr.mxu0 0.0
    %470 = vmatpush2.msra.mxu0 0.0
    %471 = vmatprep.subr.mxu0 0.0
    %472 = vmatpush2.msra.mxu0 0.0
    %473 = vmatprep.subr.mxu0 0.0
    %474 = vmatpush2.msra.mxu0 0.0
    %475 = vmatprep.subr.mxu0 0.0
    %476 = vmatpush2.msra.mxu0 0.0
    %477 = vmatprep.subr.mxu0 0.0
    %478 = vmatpush2.msra.mxu0 0.0
    %479 = vmatprep.subr.mxu0 0.0
    %480 = vmatpush2.msra.mxu0 0.0
    %481 = vmatprep.subr.mxu0 0.0
    %482 = vmatpush2.msra.mxu0 0.0
    %483 = vmatprep.subr.mxu0 0.0
    %484 = vmatpush2.msra.mxu0 0.0
    %485 = vmatprep.subr.mxu0 0.0
    %486 = vmatpush2.msra.mxu0 0.0
    %487 = vmatprep.mubr.f32.mxu0 0.0
    %488 = vmatmul.mubr.f32.gmra.mxu0 %v421
    %v489 = vpop.f32.mrf.mxu0
    %v490 = vadd.f32 0.0, %v489
    %v491 = vpop.f32.mrf.mxu0
    %492 = vdwg.mxu0
    %493 = vst.msk [vmem:[#allocation2] sm:$0xff] %vm165, %v414
    %494 = vst.msk [vmem:[#allocation2 + $0x8] sm:$0xff] %vm165, %v490
    %495 = vrot.lane.b32.xlu0 %v154, 120
    %v496 = vpop.permute.xlu0 %495
    %497 = vrot.lane.b32.xlu0 %v154, 88
    %v498 = vpop.permute.xlu0 %497
    %v499 = vsel %vm165, %v496, 0
    %v501 = vsel %vm165, %v498, 0
    %503 = vmatprep.subr.mxu0 0.0
    %504 = vmatpush1.xpose.msra.mxu0 0.0
    %505 = vmatprep.subr.mxu0 0.0
    %506 = vmatpush1.xpose.msra.mxu0 0.0
    %507 = vmatprep.subr.mxu0 0.0
    %508 = vmatpush1.xpose.msra.mxu0 0.0
    %509 = vmatprep.subr.mxu0 0.0
    %510 = vmatpush1.xpose.msra.mxu0 0.0
    %511 = vmatprep.subr.mxu0 0.0
    %512 = vmatpush1.xpose.msra.mxu0 0.0
    %513 = vmatprep.subr.mxu0 0.0
    %514 = vmatpush1.xpose.msra.mxu0 0.0
    %515 = vmatprep.subr.mxu0 0.0
    %516 = vmatpush1.xpose.msra.mxu0 0.0
    %517 = vmatprep.subr.mxu0 0.0
    %518 = vmatpush1.xpose.msra.mxu0 0.0
    %519 = vmatprep.subr.mxu0 0.0
    %520 = vmatpush1.xpose.msra.mxu0 0.0
    %521 = vmatprep.subr.mxu0 0.0
    %522 = vmatpush1.xpose.msra.mxu0 0.0
    %523 = vmatprep.subr.mxu0 0.0
    %524 = vmatpush1.xpose.msra.mxu0 0.0
    %525 = vmatprep.subr.mxu0 0.0
    %526 = vmatpush1.xpose.msra.mxu0 0.0
    %527 = vmatprep.subr.mxu0 0.0
    %528 = vmatpush1.xpose.msra.mxu0 0.0
    %529 = vmatprep.subr.mxu0 0.0
    %530 = vmatpush1.xpose.msra.mxu0 0.0
    %531 = vmatprep.subr.mxu0 0.0
    %532 = vmatpush1.xpose.msra.mxu0 0.0
    %533 = vmatprep.subr.mxu0 0.0
    %534 = vmatpush1.xpose.msra.mxu0 %v501
    %535 = vmatprep.subr.mxu0 0.0
    %536 = vmatpush2.xpose.msra.mxu0 0.0
    %537 = vmatprep.subr.mxu0 0.0
    %538 = vmatpush2.xpose.msra.mxu0 0.0
    %539 = vmatprep.subr.mxu0 0.0
    %540 = vmatpush2.xpose.msra.mxu0 0.0
    %541 = vmatprep.subr.mxu0 0.0
    %542 = vmatpush2.xpose.msra.mxu0 0.0
    %543 = vmatprep.subr.mxu0 0.0
    %544 = vmatpush2.xpose.msra.mxu0 0.0
    %545 = vmatprep.subr.mxu0 0.0
    %546 = vmatpush2.xpose.msra.mxu0 0.0
    %547 = vmatprep.subr.mxu0 0.0
    %548 = vmatpush2.xpose.msra.mxu0 0.0
    %549 = vmatprep.subr.mxu0 0.0
    %550 = vmatpush2.xpose.msra.mxu0 0.0
    %551 = vmatprep.subr.mxu0 0.0
    %552 = vmatpush2.xpose.msra.mxu0 0.0
    %553 = vmatprep.subr.mxu0 0.0
    %554 = vmatpush2.xpose.msra.mxu0 0.0
    %555 = vmatprep.subr.mxu0 0.0
    %556 = vmatpush2.xpose.msra.mxu0 0.0
    %557 = vmatprep.subr.mxu0 0.0
    %558 = vmatpush2.xpose.msra.mxu0 0.0
    %559 = vmatprep.subr.mxu0 0.0
    %560 = vmatpush2.xpose.msra.mxu0 0.0
    %561 = vmatprep.subr.mxu0 0.0
    %562 = vmatpush2.xpose.msra.mxu0 0.0
    %563 = vmatprep.subr.mxu0 0.0
    %564 = vmatpush2.xpose.msra.mxu0 0.0
    %565 = vmatprep.subr.mxu0 0.0
    %566 = vmatpush2.xpose.msra.mxu0 0.0
    %567 = vmatprep.mubr.f32.mxu0 0.0
    %568 = vmatmul.mubr.f32.gmra.mxu0 %v499
    %v569 = vpop.f32.mrf.mxu0
    %v570 = vadd.f32 0.0, %v569
    %v571 = vpop.f32.mrf.mxu0
    %572 = vdwg.mxu0
    %573 = vrot.lane.b32.xlu0 %v159, 120
    %v574 = vpop.permute.xlu0 %573
    %575 = vrot.lane.b32.xlu0 %v159, 88
    %v576 = vpop.permute.xlu0 %575
    %v577 = vsel %vm165, %v574, 0
    %v579 = vsel %vm165, %v576, 0
    %581 = vmatprep.subr.mxu0 0.0
    %582 = vmatpush1.xpose.msra.mxu0 0.0
    %583 = vmatprep.subr.mxu0 0.0
    %584 = vmatpush1.xpose.msra.mxu0 0.0
    %585 = vmatprep.subr.mxu0 0.0
    %586 = vmatpush1.xpose.msra.mxu0 0.0
    %587 = vmatprep.subr.mxu0 0.0
    %588 = vmatpush1.xpose.msra.mxu0 0.0
    %589 = vmatprep.subr.mxu0 0.0
    %590 = vmatpush1.xpose.msra.mxu0 0.0
    %591 = vmatprep.subr.mxu0 0.0
    %592 = vmatpush1.xpose.msra.mxu0 0.0
    %593 = vmatprep.subr.mxu0 0.0
    %594 = vmatpush1.xpose.msra.mxu0 0.0
    %595 = vmatprep.subr.mxu0 0.0
    %596 = vmatpush1.xpose.msra.mxu0 0.0
    %597 = vmatprep.subr.mxu0 0.0
    %598 = vmatpush1.xpose.msra.mxu0 0.0
    %599 = vmatprep.subr.mxu0 0.0
    %600 = vmatpush1.xpose.msra.mxu0 0.0
    %601 = vmatprep.subr.mxu0 0.0
    %602 = vmatpush1.xpose.msra.mxu0 0.0
    %603 = vmatprep.subr.mxu0 0.0
    %604 = vmatpush1.xpose.msra.mxu0 0.0
    %605 = vmatprep.subr.mxu0 0.0
    %606 = vmatpush1.xpose.msra.mxu0 0.0
    %607 = vmatprep.subr.mxu0 0.0
    %608 = vmatpush1.xpose.msra.mxu0 0.0
    %609 = vmatprep.subr.mxu0 0.0
    %610 = vmatpush1.xpose.msra.mxu0 0.0
    %611 = vmatprep.subr.mxu0 0.0
    %612 = vmatpush1.xpose.msra.mxu0 %v579
    %613 = vmatprep.subr.mxu0 0.0
    %614 = vmatpush2.xpose.msra.mxu0 0.0
    %615 = vmatprep.subr.mxu0 0.0
    %616 = vmatpush2.xpose.msra.mxu0 0.0
    %617 = vmatprep.subr.mxu0 0.0
    %618 = vmatpush2.xpose.msra.mxu0 0.0
    %619 = vmatprep.subr.mxu0 0.0
    %620 = vmatpush2.xpose.msra.mxu0 0.0
    %621 = vmatprep.subr.mxu0 0.0
    %622 = vmatpush2.xpose.msra.mxu0 0.0
    %623 = vmatprep.subr.mxu0 0.0
    %624 = vmatpush2.xpose.msra.mxu0 0.0
    %625 = vmatprep.subr.mxu0 0.0
    %626 = vmatpush2.xpose.msra.mxu0 0.0
    %627 = vmatprep.subr.mxu0 0.0
    %628 = vmatpush2.xpose.msra.mxu0 0.0
    %629 = vmatprep.subr.mxu0 0.0
    %630 = vmatpush2.xpose.msra.mxu0 0.0
    %631 = vmatprep.subr.mxu0 0.0
    %632 = vmatpush2.xpose.msra.mxu0 0.0
    %633 = vmatprep.subr.mxu0 0.0
    %634 = vmatpush2.xpose.msra.mxu0 0.0
    %635 = vmatprep.subr.mxu0 0.0
    %636 = vmatpush2.xpose.msra.mxu0 0.0
    %637 = vmatprep.subr.mxu0 0.0
    %638 = vmatpush2.xpose.msra.mxu0 0.0
    %639 = vmatprep.subr.mxu0 0.0
    %640 = vmatpush2.xpose.msra.mxu0 0.0
    %641 = vmatprep.subr.mxu0 0.0
    %642 = vmatpush2.xpose.msra.mxu0 0.0
    %643 = vmatprep.subr.mxu0 0.0
    %644 = vmatpush2.xpose.msra.mxu0 0.0
    %645 = vmatprep.mubr.f32.mxu0 0.0
    %646 = vmatmul.mubr.f32.gmra.mxu0 %v577
    %v647 = vpop.f32.mrf.mxu0
    %v648 = vadd.f32 0.0, %v647
    %v649 = vpop.f32.mrf.mxu0
    %650 = vdwg.mxu0
    %v651 = vmul.f32 %v570, 0.35355338
    %v652 = vmul.f32 %v648, 0.35355338
    %v653 = vsel %vm165, %v651, -inf
    %654 = vmax.xlane.f32.xlu0 %v653
    %v655 = vpop.xlane.xlu0 %654
    %v656 = vsel %vm165, %v652, -inf
    %657 = vmax.xlane.f32.xlu0 %v656
    %v658 = vpop.xlane.xlu0 %657
    %v659 = vsub.f32 %v651, %v655
    %v660 = vsub.f32 %v652, %v658
    %v661 = vmul.f32 %v659, 1.442695
    %v662 = vpow.pop %v661
    %v663 = vmul.f32 %v660, 1.442695
    %v664 = vpow.pop %v663
    %v665 = vsel %vm165, %v662, 0.0
    %666 = vadd.xlane.f32.xlu0 %v665
    %v667 = vpop.xlane.xlu0 %666
    %v668 = vsel %vm165, %v664, 0.0
    %669 = vadd.xlane.f32.xlu0 %v668
    %v670 = vpop.xlane.xlu0 %669
    %v671 = vrcp.pop %v667
    %v672 = vrcp.pop %v670
    %v673 = vmul.f32 %v662, %v671
    %v674 = vmul.f32 %v664, %v672
    %675 = vrot.lane.b32.xlu0 %v154, 56
    %v676 = vpop.permute.xlu0 %675
    %v679 = vsel %vm165, %v673, 0
    %681 = vmatprep.subr.mxu0 0.0
    %682 = vmatpush1.msra.mxu0 0.0
    %683 = vmatprep.subr.mxu0 0.0
    %684 = vmatpush1.msra.mxu0 0.0
    %685 = vmatprep.subr.mxu0 0.0
    %686 = vmatpush1.msra.mxu0 0.0
    %687 = vmatprep.subr.mxu0 0.0
    %688 = vmatpush1.msra.mxu0 0.0
    %689 = vmatprep.subr.mxu0 0.0
    %690 = vmatpush1.msra.mxu0 0.0
    %691 = vmatprep.subr.mxu0 0.0
    %692 = vmatpush1.msra.mxu0 0.0
    %693 = vmatprep.subr.mxu0 0.0
    %694 = vmatpush1.msra.mxu0 0.0
    %695 = vmatprep.subr.mxu0 0.0
    %696 = vmatpush1.msra.mxu0 0.0
    %697 = vmatprep.subr.mxu0 0.0
    %698 = vmatpush1.msra.mxu0 0.0
    %699 = vmatprep.subr.mxu0 0.0
    %700 = vmatpush1.msra.mxu0 0.0
    %701 = vmatprep.subr.mxu0 0.0
    %702 = vmatpush1.msra.mxu0 0.0
    %703 = vmatprep.subr.mxu0 0.0
    %704 = vmatpush1.msra.mxu0 0.0
    %705 = vmatprep.subr.mxu0 0.0
    %706 = vmatpush1.msra.mxu0 0.0
    %707 = vmatprep.subr.mxu0 0.0
    %708 = vmatpush1.msra.mxu0 0.0
    %709 = vmatprep.subr.mxu0 0.0
    %710 = vmatpush1.msra.mxu0 0.0
    %711 = vmatprep.subr.mxu0 0.0
    %712 = vmatpush1.msra.mxu0 %v676
    %713 = vmatprep.subr.mxu0 0.0
    %714 = vmatpush2.msra.mxu0 0.0
    %715 = vmatprep.subr.mxu0 0.0
    %716 = vmatpush2.msra.mxu0 0.0
    %717 = vmatprep.subr.mxu0 0.0
    %718 = vmatpush2.msra.mxu0 0.0
    %719 = vmatprep.subr.mxu0 0.0
    %720 = vmatpush2.msra.mxu0 0.0
    %721 = vmatprep.subr.mxu0 0.0
    %722 = vmatpush2.msra.mxu0 0.0
    %723 = vmatprep.subr.mxu0 0.0
    %724 = vmatpush2.msra.mxu0 0.0
    %725 = vmatprep.subr.mxu0 0.0
    %726 = vmatpush2.msra.mxu0 0.0
    %727 = vmatprep.subr.mxu0 0.0
    %728 = vmatpush2.msra.mxu0 0.0
    %729 = vmatprep.subr.mxu0 0.0
    %730 = vmatpush2.msra.mxu0 0.0
    %731 = vmatprep.subr.mxu0 0.0
    %732 = vmatpush2.msra.mxu0 0.0
    %733 = vmatprep.subr.mxu0 0.0
    %734 = vmatpush2.msra.mxu0 0.0
    %735 = vmatprep.subr.mxu0 0.0
    %736 = vmatpush2.msra.mxu0 0.0
    %737 = vmatprep.subr.mxu0 0.0
    %738 = vmatpush2.msra.mxu0 0.0
    %739 = vmatprep.subr.mxu0 0.0
    %740 = vmatpush2.msra.mxu0 0.0
    %741 = vmatprep.subr.mxu0 0.0
    %742 = vmatpush2.msra.mxu0 0.0
    %743 = vmatprep.subr.mxu0 0.0
    %744 = vmatpush2.msra.mxu0 0.0
    %745 = vmatprep.mubr.f32.mxu0 0.0
    %746 = vmatmul.mubr.f32.gmra.mxu0 %v679
    %v747 = vpop.f32.mrf.mxu0
    %v748 = vadd.f32 0.0, %v747
    %v749 = vpop.f32.mrf.mxu0
    %750 = vdwg.mxu0
    %751 = vrot.lane.b32.xlu0 %v159, 56
    %v752 = vpop.permute.xlu0 %751
    %v755 = vsel %vm165, %v674, 0
    %757 = vmatprep.subr.mxu0 0.0
    %758 = vmatpush1.msra.mxu0 0.0
    %759 = vmatprep.subr.mxu0 0.0
    %760 = vmatpush1.msra.mxu0 0.0
    %761 = vmatprep.subr.mxu0 0.0
    %762 = vmatpush1.msra.mxu0 0.0
    %763 = vmatprep.subr.mxu0 0.0
    %764 = vmatpush1.msra.mxu0 0.0
    %765 = vmatprep.subr.mxu0 0.0
    %766 = vmatpush1.msra.mxu0 0.0
    %767 = vmatprep.subr.mxu0 0.0
    %768 = vmatpush1.msra.mxu0 0.0
    %769 = vmatprep.subr.mxu0 0.0
    %770 = vmatpush1.msra.mxu0 0.0
    %771 = vmatprep.subr.mxu0 0.0
    %772 = vmatpush1.msra.mxu0 0.0
    %773 = vmatprep.subr.mxu0 0.0
    %774 = vmatpush1.msra.mxu0 0.0
    %775 = vmatprep.subr.mxu0 0.0
    %776 = vmatpush1.msra.mxu0 0.0
    %777 = vmatprep.subr.mxu0 0.0
    %778 = vmatpush1.msra.mxu0 0.0
    %779 = vmatprep.subr.mxu0 0.0
    %780 = vmatpush1.msra.mxu0 0.0
    %781 = vmatprep.subr.mxu0 0.0
    %782 = vmatpush1.msra.mxu0 0.0
    %783 = vmatprep.subr.mxu0 0.0
    %784 = vmatpush1.msra.mxu0 0.0
    %785 = vmatprep.subr.mxu0 0.0
    %786 = vmatpush1.msra.mxu0 0.0
    %787 = vmatprep.subr.mxu0 0.0
    %788 = vmatpush1.msra.mxu0 %v752
    %789 = vmatprep.subr.mxu0 0.0
    %790 = vmatpush2.msra.mxu0 0.0
    %791 = vmatprep.subr.mxu0 0.0
    %792 = vmatpush2.msra.mxu0 0.0
    %793 = vmatprep.subr.mxu0 0.0
    %794 = vmatpush2.msra.mxu0 0.0
    %795 = vmatprep.subr.mxu0 0.0
    %796 = vmatpush2.msra.mxu0 0.0
    %797 = vmatprep.subr.mxu0 0.0
    %798 = vmatpush2.msra.mxu0 0.0
    %799 = vmatprep.subr.mxu0 0.0
    %800 = vmatpush2.msra.mxu0 0.0
    %801 = vmatprep.subr.mxu0 0.0
    %802 = vmatpush2.msra.mxu0 0.0
    %803 = vmatprep.subr.mxu0 0.0
    %804 = vmatpush2.msra.mxu0 0.0
    %805 = vmatprep.subr.mxu0 0.0
    %806 = vmatpush2.msra.mxu0 0.0
    %807 = vmatprep.subr.mxu0 0.0
    %808 = vmatpush2.msra.mxu0 0.0
    %809 = vmatprep.subr.mxu0 0.0
    %810 = vmatpush2.msra.mxu0 0.0
    %811 = vmatprep.subr.mxu0 0.0
    %812 = vmatpush2.msra.mxu0 0.0
    %813 = vmatprep.subr.mxu0 0.0
    %814 = vmatpush2.msra.mxu0 0.0
    %815 = vmatprep.subr.mxu0 0.0
    %816 = vmatpush2.msra.mxu0 0.0
    %817 = vmatprep.subr.mxu0 0.0
    %818 = vmatpush2.msra.mxu0 0.0
    %819 = vmatprep.subr.mxu0 0.0
    %820 = vmatpush2.msra.mxu0 0.0
    %821 = vmatprep.mubr.f32.mxu0 0.0
    %822 = vmatmul.mubr.f32.gmra.mxu0 %v755
    %v823 = vpop.f32.mrf.mxu0
    %v824 = vadd.f32 0.0, %v823
    %v825 = vpop.f32.mrf.mxu0
    %826 = vdwg.mxu0
    %829 = vrot.lane.b32.xlu0 %v748, 8
    %v830 = vpop.permute.xlu0 %829
    %831 = vrot.lane.b32.xlu0 %v824, 8
    %v832 = vpop.permute.xlu0 %831
    %vm835 = vcmask 130112
    %836 = vst.msk [vmem:[#allocation2] sm:$0xff] %vm835, %v830
    %837 = vst.msk [vmem:[#allocation2 + $0x8] sm:$0xff] %vm835, %v832
    %838 = vrot.lane.b32.xlu0 %v154, 112
    %v839 = vpop.permute.xlu0 %838
    %840 = vrot.lane.b32.xlu0 %v154, 80
    %v841 = vpop.permute.xlu0 %840
    %v842 = vsel %vm165, %v839, 0
    %v844 = vsel %vm165, %v841, 0
    %846 = vmatprep.subr.mxu0 0.0
    %847 = vmatpush1.xpose.msra.mxu0 0.0
    %848 = vmatprep.subr.mxu0 0.0
    %849 = vmatpush1.xpose.msra.mxu0 0.0
    %850 = vmatprep.subr.mxu0 0.0
    %851 = vmatpush1.xpose.msra.mxu0 0.0
    %852 = vmatprep.subr.mxu0 0.0
    %853 = vmatpush1.xpose.msra.mxu0 0.0
    %854 = vmatprep.subr.mxu0 0.0
    %855 = vmatpush1.xpose.msra.mxu0 0.0
    %856 = vmatprep.subr.mxu0 0.0
    %857 = vmatpush1.xpose.msra.mxu0 0.0
    %858 = vmatprep.subr.mxu0 0.0
    %859 = vmatpush1.xpose.msra.mxu0 0.0
    %860 = vmatprep.subr.mxu0 0.0
    %861 = vmatpush1.xpose.msra.mxu0 0.0
    %862 = vmatprep.subr.mxu0 0.0
    %863 = vmatpush1.xpose.msra.mxu0 0.0
    %864 = vmatprep.subr.mxu0 0.0
    %865 = vmatpush1.xpose.msra.mxu0 0.0
    %866 = vmatprep.subr.mxu0 0.0
    %867 = vmatpush1.xpose.msra.mxu0 0.0
    %868 = vmatprep.subr.mxu0 0.0
    %869 = vmatpush1.xpose.msra.mxu0 0.0
    %870 = vmatprep.subr.mxu0 0.0
    %871 = vmatpush1.xpose.msra.mxu0 0.0
    %872 = vmatprep.subr.mxu0 0.0
    %873 = vmatpush1.xpose.msra.mxu0 0.0
    %874 = vmatprep.subr.mxu0 0.0
    %875 = vmatpush1.xpose.msra.mxu0 0.0
    %876 = vmatprep.subr.mxu0 0.0
    %877 = vmatpush1.xpose.msra.mxu0 %v844
    %878 = vmatprep.subr.mxu0 0.0
    %879 = vmatpush2.xpose.msra.mxu0 0.0
    %880 = vmatprep.subr.mxu0 0.0
    %881 = vmatpush2.xpose.msra.mxu0 0.0
    %882 = vmatprep.subr.mxu0 0.0
    %883 = vmatpush2.xpose.msra.mxu0 0.0
    %884 = vmatprep.subr.mxu0 0.0
    %885 = vmatpush2.xpose.msra.mxu0 0.0
    %886 = vmatprep.subr.mxu0 0.0
    %887 = vmatpush2.xpose.msra.mxu0 0.0
    %888 = vmatprep.subr.mxu0 0.0
    %889 = vmatpush2.xpose.msra.mxu0 0.0
    %890 = vmatprep.subr.mxu0 0.0
    %891 = vmatpush2.xpose.msra.mxu0 0.0
    %892 = vmatprep.subr.mxu0 0.0
    %893 = vmatpush2.xpose.msra.mxu0 0.0
    %894 = vmatprep.subr.mxu0 0.0
    %895 = vmatpush2.xpose.msra.mxu0 0.0
    %896 = vmatprep.subr.mxu0 0.0
    %897 = vmatpush2.xpose.msra.mxu0 0.0
    %898 = vmatprep.subr.mxu0 0.0
    %899 = vmatpush2.xpose.msra.mxu0 0.0
    %900 = vmatprep.subr.mxu0 0.0
    %901 = vmatpush2.xpose.msra.mxu0 0.0
    %902 = vmatprep.subr.mxu0 0.0
    %903 = vmatpush2.xpose.msra.mxu0 0.0
    %904 = vmatprep.subr.mxu0 0.0
    %905 = vmatpush2.xpose.msra.mxu0 0.0
    %906 = vmatprep.subr.mxu0 0.0
    %907 = vmatpush2.xpose.msra.mxu0 0.0
    %908 = vmatprep.subr.mxu0 0.0
    %909 = vmatpush2.xpose.msra.mxu0 0.0
    %910 = vmatprep.mubr.f32.mxu0 0.0
    %911 = vmatmul.mubr.f32.gmra.mxu0 %v842
    %v912 = vpop.f32.mrf.mxu0
    %v913 = vadd.f32 0.0, %v912
    %v914 = vpop.f32.mrf.mxu0
    %915 = vdwg.mxu0
    %916 = vrot.lane.b32.xlu0 %v159, 112
    %v917 = vpop.permute.xlu0 %916
    %918 = vrot.lane.b32.xlu0 %v159, 80
    %v919 = vpop.permute.xlu0 %918
    %v920 = vsel %vm165, %v917, 0
    %v922 = vsel %vm165, %v919, 0
    %924 = vmatprep.subr.mxu0 0.0
    %925 = vmatpush1.xpose.msra.mxu0 0.0
    %926 = vmatprep.subr.mxu0 0.0
    %927 = vmatpush1.xpose.msra.mxu0 0.0
    %928 = vmatprep.subr.mxu0 0.0
    %929 = vmatpush1.xpose.msra.mxu0 0.0
    %930 = vmatprep.subr.mxu0 0.0
    %931 = vmatpush1.xpose.msra.mxu0 0.0
    %932 = vmatprep.subr.mxu0 0.0
    %933 = vmatpush1.xpose.msra.mxu0 0.0
    %934 = vmatprep.subr.mxu0 0.0
    %935 = vmatpush1.xpose.msra.mxu0 0.0
    %936 = vmatprep.subr.mxu0 0.0
    %937 = vmatpush1.xpose.msra.mxu0 0.0
    %938 = vmatprep.subr.mxu0 0.0
    %939 = vmatpush1.xpose.msra.mxu0 0.0
    %940 = vmatprep.subr.mxu0 0.0
    %941 = vmatpush1.xpose.msra.mxu0 0.0
    %942 = vmatprep.subr.mxu0 0.0
    %943 = vmatpush1.xpose.msra.mxu0 0.0
    %944 = vmatprep.subr.mxu0 0.0
    %945 = vmatpush1.xpose.msra.mxu0 0.0
    %946 = vmatprep.subr.mxu0 0.0
    %947 = vmatpush1.xpose.msra.mxu0 0.0
    %948 = vmatprep.subr.mxu0 0.0
    %949 = vmatpush1.xpose.msra.mxu0 0.0
    %950 = vmatprep.subr.mxu0 0.0
    %951 = vmatpush1.xpose.msra.mxu0 0.0
    %952 = vmatprep.subr.mxu0 0.0
    %953 = vmatpush1.xpose.msra.mxu0 0.0
    %954 = vmatprep.subr.mxu0 0.0
    %955 = vmatpush1.xpose.msra.mxu0 %v922
    %956 = vmatprep.subr.mxu0 0.0
    %957 = vmatpush2.xpose.msra.mxu0 0.0
    %958 = vmatprep.subr.mxu0 0.0
    %959 = vmatpush2.xpose.msra.mxu0 0.0
    %960 = vmatprep.subr.mxu0 0.0
    %961 = vmatpush2.xpose.msra.mxu0 0.0
    %962 = vmatprep.subr.mxu0 0.0
    %963 = vmatpush2.xpose.msra.mxu0 0.0
    %964 = vmatprep.subr.mxu0 0.0
    %965 = vmatpush2.xpose.msra.mxu0 0.0
    %966 = vmatprep.subr.mxu0 0.0
    %967 = vmatpush2.xpose.msra.mxu0 0.0
    %968 = vmatprep.subr.mxu0 0.0
    %969 = vmatpush2.xpose.msra.mxu0 0.0
    %970 = vmatprep.subr.mxu0 0.0
    %971 = vmatpush2.xpose.msra.mxu0 0.0
    %972 = vmatprep.subr.mxu0 0.0
    %973 = vmatpush2.xpose.msra.mxu0 0.0
    %974 = vmatprep.subr.mxu0 0.0
    %975 = vmatpush2.xpose.msra.mxu0 0.0
    %976 = vmatprep.subr.mxu0 0.0
    %977 = vmatpush2.xpose.msra.mxu0 0.0
    %978 = vmatprep.subr.mxu0 0.0
    %979 = vmatpush2.xpose.msra.mxu0 0.0
    %980 = vmatprep.subr.mxu0 0.0
    %981 = vmatpush2.xpose.msra.mxu0 0.0
    %982 = vmatprep.subr.mxu0 0.0
    %983 = vmatpush2.xpose.msra.mxu0 0.0
    %984 = vmatprep.subr.mxu0 0.0
    %985 = vmatpush2.xpose.msra.mxu0 0.0
    %986 = vmatprep.subr.mxu0 0.0
    %987 = vmatpush2.xpose.msra.mxu0 0.0
    %988 = vmatprep.mubr.f32.mxu0 0.0
    %989 = vmatmul.mubr.f32.gmra.mxu0 %v920
    %v990 = vpop.f32.mrf.mxu0
    %v991 = vadd.f32 0.0, %v990
    %v992 = vpop.f32.mrf.mxu0
    %993 = vdwg.mxu0
    %v994 = vmul.f32 %v913, 0.35355338
    %v995 = vmul.f32 %v991, 0.35355338
    %v996 = vsel %vm165, %v994, -inf
    %997 = vmax.xlane.f32.xlu0 %v996
    %v998 = vpop.xlane.xlu0 %997
    %v999 = vsel %vm165, %v995, -inf
    %1000 = vmax.xlane.f32.xlu0 %v999
    %v1001 = vpop.xlane.xlu0 %1000
    %v1002 = vsub.f32 %v994, %v998
    %v1003 = vsub.f32 %v995, %v1001
    %v1004 = vmul.f32 %v1002, 1.442695
    %v1005 = vpow.pop %v1004
    %v1006 = vmul.f32 %v1003, 1.442695
    %v1007 = vpow.pop %v1006
    %v1008 = vsel %vm165, %v1005, 0.0
    %1009 = vadd.xlane.f32.xlu0 %v1008
    %v1010 = vpop.xlane.xlu0 %1009
    %v1011 = vsel %vm165, %v1007, 0.0
    %1012 = vadd.xlane.f32.xlu0 %v1011
    %v1013 = vpop.xlane.xlu0 %1012
    %v1014 = vrcp.pop %v1010
    %v1015 = vrcp.pop %v1013
    %v1016 = vmul.f32 %v1005, %v1014
    %v1017 = vmul.f32 %v1007, %v1015
    %1018 = vrot.lane.b32.xlu0 %v154, 48
    %v1019 = vpop.permute.xlu0 %1018
    %v1022 = vsel %vm165, %v1016, 0
    %1024 = vmatprep.subr.mxu0 0.0
    %1025 = vmatpush1.msra.mxu0 0.0
    %1026 = vmatprep.subr.mxu0 0.0
    %1027 = vmatpush1.msra.mxu0 0.0
    %1028 = vmatprep.subr.mxu0 0.0
    %1029 = vmatpush1.msra.mxu0 0.0
    %1030 = vmatprep.subr.mxu0 0.0
    %1031 = vmatpush1.msra.mxu0 0.0
    %1032 = vmatprep.subr.mxu0 0.0
    %1033 = vmatpush1.msra.mxu0 0.0
    %1034 = vmatprep.subr.mxu0 0.0
    %1035 = vmatpush1.msra.mxu0 0.0
    %1036 = vmatprep.subr.mxu0 0.0
    %1037 = vmatpush1.msra.mxu0 0.0
    %1038 = vmatprep.subr.mxu0 0.0
    %1039 = vmatpush1.msra.mxu0 0.0
    %1040 = vmatprep.subr.mxu0 0.0
    %1041 = vmatpush1.msra.mxu0 0.0
    %1042 = vmatprep.subr.mxu0 0.0
    %1043 = vmatpush1.msra.mxu0 0.0
    %1044 = vmatprep.subr.mxu0 0.0
    %1045 = vmatpush1.msra.mxu0 0.0
    %1046 = vmatprep.subr.mxu0 0.0
    %1047 = vmatpush1.msra.mxu0 0.0
    %1048 = vmatprep.subr.mxu0 0.0
    %1049 = vmatpush1.msra.mxu0 0.0
    %1050 = vmatprep.subr.mxu0 0.0
    %1051 = vmatpush1.msra.mxu0 0.0
    %1052 = vmatprep.subr.mxu0 0.0
    %1053 = vmatpush1.msra.mxu0 0.0
    %1054 = vmatprep.subr.mxu0 0.0
    %1055 = vmatpush1.msra.mxu0 %v1019
    %1056 = vmatprep.subr.mxu0 0.0
    %1057 = vmatpush2.msra.mxu0 0.0
    %1058 = vmatprep.subr.mxu0 0.0
    %1059 = vmatpush2.msra.mxu0 0.0
    %1060 = vmatprep.subr.mxu0 0.0
    %1061 = vmatpush2.msra.mxu0 0.0
    %1062 = vmatprep.subr.mxu0 0.0
    %1063 = vmatpush2.msra.mxu0 0.0
    %1064 = vmatprep.subr.mxu0 0.0
    %1065 = vmatpush2.msra.mxu0 0.0
    %1066 = vmatprep.subr.mxu0 0.0
    %1067 = vmatpush2.msra.mxu0 0.0
    %1068 = vmatprep.subr.mxu0 0.0
    %1069 = vmatpush2.msra.mxu0 0.0
    %1070 = vmatprep.subr.mxu0 0.0
    %1071 = vmatpush2.msra.mxu0 0.0
    %1072 = vmatprep.subr.mxu0 0.0
    %1073 = vmatpush2.msra.mxu0 0.0
    %1074 = vmatprep.subr.mxu0 0.0
    %1075 = vmatpush2.msra.mxu0 0.0
    %1076 = vmatprep.subr.mxu0 0.0
    %1077 = vmatpush2.msra.mxu0 0.0
    %1078 = vmatprep.subr.mxu0 0.0
    %1079 = vmatpush2.msra.mxu0 0.0
    %1080 = vmatprep.subr.mxu0 0.0
    %1081 = vmatpush2.msra.mxu0 0.0
    %1082 = vmatprep.subr.mxu0 0.0
    %1083 = vmatpush2.msra.mxu0 0.0
    %1084 = vmatprep.subr.mxu0 0.0
    %1085 = vmatpush2.msra.mxu0 0.0
    %1086 = vmatprep.subr.mxu0 0.0
    %1087 = vmatpush2.msra.mxu0 0.0
    %1088 = vmatprep.mubr.f32.mxu0 0.0
    %1089 = vmatmul.mubr.f32.gmra.mxu0 %v1022
    %v1090 = vpop.f32.mrf.mxu0
    %v1091 = vadd.f32 0.0, %v1090
    %v1092 = vpop.f32.mrf.mxu0
    %1093 = vdwg.mxu0
    %1094 = vrot.lane.b32.xlu0 %v159, 48
    %v1095 = vpop.permute.xlu0 %1094
    %v1098 = vsel %vm165, %v1017, 0
    %1100 = vmatprep.subr.mxu0 0.0
    %1101 = vmatpush1.msra.mxu0 0.0
    %1102 = vmatprep.subr.mxu0 0.0
    %1103 = vmatpush1.msra.mxu0 0.0
    %1104 = vmatprep.subr.mxu0 0.0
    %1105 = vmatpush1.msra.mxu0 0.0
    %1106 = vmatprep.subr.mxu0 0.0
    %1107 = vmatpush1.msra.mxu0 0.0
    %1108 = vmatprep.subr.mxu0 0.0
    %1109 = vmatpush1.msra.mxu0 0.0
    %1110 = vmatprep.subr.mxu0 0.0
    %1111 = vmatpush1.msra.mxu0 0.0
    %1112 = vmatprep.subr.mxu0 0.0
    %1113 = vmatpush1.msra.mxu0 0.0
    %1114 = vmatprep.subr.mxu0 0.0
    %1115 = vmatpush1.msra.mxu0 0.0
    %1116 = vmatprep.subr.mxu0 0.0
    %1117 = vmatpush1.msra.mxu0 0.0
    %1118 = vmatprep.subr.mxu0 0.0
    %1119 = vmatpush1.msra.mxu0 0.0
    %1120 = vmatprep.subr.mxu0 0.0
    %1121 = vmatpush1.msra.mxu0 0.0
    %1122 = vmatprep.subr.mxu0 0.0
    %1123 = vmatpush1.msra.mxu0 0.0
    %1124 = vmatprep.subr.mxu0 0.0
    %1125 = vmatpush1.msra.mxu0 0.0
    %1126 = vmatprep.subr.mxu0 0.0
    %1127 = vmatpush1.msra.mxu0 0.0
    %1128 = vmatprep.subr.mxu0 0.0
    %1129 = vmatpush1.msra.mxu0 0.0
    %1130 = vmatprep.subr.mxu0 0.0
    %1131 = vmatpush1.msra.mxu0 %v1095
    %1132 = vmatprep.subr.mxu0 0.0
    %1133 = vmatpush2.msra.mxu0 0.0
    %1134 = vmatprep.subr.mxu0 0.0
    %1135 = vmatpush2.msra.mxu0 0.0
    %1136 = vmatprep.subr.mxu0 0.0
    %1137 = vmatpush2.msra.mxu0 0.0
    %1138 = vmatprep.subr.mxu0 0.0
    %1139 = vmatpush2.msra.mxu0 0.0
    %1140 = vmatprep.subr.mxu0 0.0
    %1141 = vmatpush2.msra.mxu0 0.0
    %1142 = vmatprep.subr.mxu0 0.0
    %1143 = vmatpush2.msra.mxu0 0.0
    %1144 = vmatprep.subr.mxu0 0.0
    %1145 = vmatpush2.msra.mxu0 0.0
    %1146 = vmatprep.subr.mxu0 0.0
    %1147 = vmatpush2.msra.mxu0 0.0
    %1148 = vmatprep.subr.mxu0 0.0
    %1149 = vmatpush2.msra.mxu0 0.0
    %1150 = vmatprep.subr.mxu0 0.0
    %1151 = vmatpush2.msra.mxu0 0.0
    %1152 = vmatprep.subr.mxu0 0.0
    %1153 = vmatpush2.msra.mxu0 0.0
    %1154 = vmatprep.subr.mxu0 0.0
    %1155 = vmatpush2.msra.mxu0 0.0
    %1156 = vmatprep.subr.mxu0 0.0
    %1157 = vmatpush2.msra.mxu0 0.0
    %1158 = vmatprep.subr.mxu0 0.0
    %1159 = vmatpush2.msra.mxu0 0.0
    %1160 = vmatprep.subr.mxu0 0.0
    %1161 = vmatpush2.msra.mxu0 0.0
    %1162 = vmatprep.subr.mxu0 0.0
    %1163 = vmatpush2.msra.mxu0 0.0
    %1164 = vmatprep.mubr.f32.mxu0 0.0
    %1165 = vmatmul.mubr.f32.gmra.mxu0 %v1098
    %v1166 = vpop.f32.mrf.mxu0
    %v1167 = vadd.f32 0.0, %v1166
    %v1168 = vpop.f32.mrf.mxu0
    %1169 = vdwg.mxu0
    %1172 = vrot.lane.b32.xlu0 %v1091, 16
    %v1173 = vpop.permute.xlu0 %1172
    %1174 = vrot.lane.b32.xlu0 %v1167, 16
    %v1175 = vpop.permute.xlu0 %1174
    %vm1178 = vcmask 195712
    %1179 = vst.msk [vmem:[#allocation2] sm:$0xff] %vm1178, %v1173
    %1180 = vst.msk [vmem:[#allocation2 + $0x8] sm:$0xff] %vm1178, %v1175
    %1181 = vrot.lane.b32.xlu0 %v154, 104
    %v1182 = vpop.permute.xlu0 %1181
    %1183 = vrot.lane.b32.xlu0 %v154, 72
    %v1184 = vpop.permute.xlu0 %1183
    %v1185 = vsel %vm165, %v1182, 0
    %v1187 = vsel %vm165, %v1184, 0
    %1189 = vmatprep.subr.mxu0 0.0
    %1190 = vmatpush1.xpose.msra.mxu0 0.0
    %1191 = vmatprep.subr.mxu0 0.0
    %1192 = vmatpush1.xpose.msra.mxu0 0.0
    %1193 = vmatprep.subr.mxu0 0.0
    %1194 = vmatpush1.xpose.msra.mxu0 0.0
    %1195 = vmatprep.subr.mxu0 0.0
    %1196 = vmatpush1.xpose.msra.mxu0 0.0
    %1197 = vmatprep.subr.mxu0 0.0
    %1198 = vmatpush1.xpose.msra.mxu0 0.0
    %1199 = vmatprep.subr.mxu0 0.0
    %1200 = vmatpush1.xpose.msra.mxu0 0.0
    %1201 = vmatprep.subr.mxu0 0.0
    %1202 = vmatpush1.xpose.msra.mxu0 0.0
    %1203 = vmatprep.subr.mxu0 0.0
    %1204 = vmatpush1.xpose.msra.mxu0 0.0
    %1205 = vmatprep.subr.mxu0 0.0
    %1206 = vmatpush1.xpose.msra.mxu0 0.0
    %1207 = vmatprep.subr.mxu0 0.0
    %1208 = vmatpush1.xpose.msra.mxu0 0.0
    %1209 = vmatprep.subr.mxu0 0.0
    %1210 = vmatpush1.xpose.msra.mxu0 0.0
    %1211 = vmatprep.subr.mxu0 0.0
    %1212 = vmatpush1.xpose.msra.mxu0 0.0
    %1213 = vmatprep.subr.mxu0 0.0
    %1214 = vmatpush1.xpose.msra.mxu0 0.0
    %1215 = vmatprep.subr.mxu0 0.0
    %1216 = vmatpush1.xpose.msra.mxu0 0.0
    %1217 = vmatprep.subr.mxu0 0.0
    %1218 = vmatpush1.xpose.msra.mxu0 0.0
    %1219 = vmatprep.subr.mxu0 0.0
    %1220 = vmatpush1.xpose.msra.mxu0 %v1187
    %1221 = vmatprep.subr.mxu0 0.0
    %1222 = vmatpush2.xpose.msra.mxu0 0.0
    %1223 = vmatprep.subr.mxu0 0.0
    %1224 = vmatpush2.xpose.msra.mxu0 0.0
    %1225 = vmatprep.subr.mxu0 0.0
    %1226 = vmatpush2.xpose.msra.mxu0 0.0
    %1227 = vmatprep.subr.mxu0 0.0
    %1228 = vmatpush2.xpose.msra.mxu0 0.0
    %1229 = vmatprep.subr.mxu0 0.0
    %1230 = vmatpush2.xpose.msra.mxu0 0.0
    %1231 = vmatprep.subr.mxu0 0.0
    %1232 = vmatpush2.xpose.msra.mxu0 0.0
    %1233 = vmatprep.subr.mxu0 0.0
    %1234 = vmatpush2.xpose.msra.mxu0 0.0
    %1235 = vmatprep.subr.mxu0 0.0
    %1236 = vmatpush2.xpose.msra.mxu0 0.0
    %1237 = vmatprep.subr.mxu0 0.0
    %1238 = vmatpush2.xpose.msra.mxu0 0.0
    %1239 = vmatprep.subr.mxu0 0.0
    %1240 = vmatpush2.xpose.msra.mxu0 0.0
    %1241 = vmatprep.subr.mxu0 0.0
    %1242 = vmatpush2.xpose.msra.mxu0 0.0
    %1243 = vmatprep.subr.mxu0 0.0
    %1244 = vmatpush2.xpose.msra.mxu0 0.0
    %1245 = vmatprep.subr.mxu0 0.0
    %1246 = vmatpush2.xpose.msra.mxu0 0.0
    %1247 = vmatprep.subr.mxu0 0.0
    %1248 = vmatpush2.xpose.msra.mxu0 0.0
    %1249 = vmatprep.subr.mxu0 0.0
    %1250 = vmatpush2.xpose.msra.mxu0 0.0
    %1251 = vmatprep.subr.mxu0 0.0
    %1252 = vmatpush2.xpose.msra.mxu0 0.0
    %1253 = vmatprep.mubr.f32.mxu0 0.0
    %1254 = vmatmul.mubr.f32.gmra.mxu0 %v1185
    %v1255 = vpop.f32.mrf.mxu0
    %v1256 = vadd.f32 0.0, %v1255
    %v1257 = vpop.f32.mrf.mxu0
    %1258 = vdwg.mxu0
    %1259 = vrot.lane.b32.xlu0 %v159, 104
    %v1260 = vpop.permute.xlu0 %1259
    %1261 = vrot.lane.b32.xlu0 %v159, 72
    %v1262 = vpop.permute.xlu0 %1261
    %v1263 = vsel %vm165, %v1260, 0
    %v1265 = vsel %vm165, %v1262, 0
    %1267 = vmatprep.subr.mxu0 0.0
    %1268 = vmatpush1.xpose.msra.mxu0 0.0
    %1269 = vmatprep.subr.mxu0 0.0
    %1270 = vmatpush1.xpose.msra.mxu0 0.0
    %1271 = vmatprep.subr.mxu0 0.0
    %1272 = vmatpush1.xpose.msra.mxu0 0.0
    %1273 = vmatprep.subr.mxu0 0.0
    %1274 = vmatpush1.xpose.msra.mxu0 0.0
    %1275 = vmatprep.subr.mxu0 0.0
    %1276 = vmatpush1.xpose.msra.mxu0 0.0
    %1277 = vmatprep.subr.mxu0 0.0
    %1278 = vmatpush1.xpose.msra.mxu0 0.0
    %1279 = vmatprep.subr.mxu0 0.0
    %1280 = vmatpush1.xpose.msra.mxu0 0.0
    %1281 = vmatprep.subr.mxu0 0.0
    %1282 = vmatpush1.xpose.msra.mxu0 0.0
    %1283 = vmatprep.subr.mxu0 0.0
    %1284 = vmatpush1.xpose.msra.mxu0 0.0
    %1285 = vmatprep.subr.mxu0 0.0
    %1286 = vmatpush1.xpose.msra.mxu0 0.0
    %1287 = vmatprep.subr.mxu0 0.0
    %1288 = vmatpush1.xpose.msra.mxu0 0.0
    %1289 = vmatprep.subr.mxu0 0.0
    %1290 = vmatpush1.xpose.msra.mxu0 0.0
    %1291 = vmatprep.subr.mxu0 0.0
    %1292 = vmatpush1.xpose.msra.mxu0 0.0
    %1293 = vmatprep.subr.mxu0 0.0
    %1294 = vmatpush1.xpose.msra.mxu0 0.0
    %1295 = vmatprep.subr.mxu0 0.0
    %1296 = vmatpush1.xpose.msra.mxu0 0.0
    %1297 = vmatprep.subr.mxu0 0.0
    %1298 = vmatpush1.xpose.msra.mxu0 %v1265
    %1299 = vmatprep.subr.mxu0 0.0
    %1300 = vmatpush2.xpose.msra.mxu0 0.0
    %1301 = vmatprep.subr.mxu0 0.0
    %1302 = vmatpush2.xpose.msra.mxu0 0.0
    %1303 = vmatprep.subr.mxu0 0.0
    %1304 = vmatpush2.xpose.msra.mxu0 0.0
    %1305 = vmatprep.subr.mxu0 0.0
    %1306 = vmatpush2.xpose.msra.mxu0 0.0
    %1307 = vmatprep.subr.mxu0 0.0
    %1308 = vmatpush2.xpose.msra.mxu0 0.0
    %1309 = vmatprep.subr.mxu0 0.0
    %1310 = vmatpush2.xpose.msra.mxu0 0.0
    %1311 = vmatprep.subr.mxu0 0.0
    %1312 = vmatpush2.xpose.msra.mxu0 0.0
    %1313 = vmatprep.subr.mxu0 0.0
    %1314 = vmatpush2.xpose.msra.mxu0 0.0
    %1315 = vmatprep.subr.mxu0 0.0
    %1316 = vmatpush2.xpose.msra.mxu0 0.0
    %1317 = vmatprep.subr.mxu0 0.0
    %1318 = vmatpush2.xpose.msra.mxu0 0.0
    %1319 = vmatprep.subr.mxu0 0.0
    %1320 = vmatpush2.xpose.msra.mxu0 0.0
    %1321 = vmatprep.subr.mxu0 0.0
    %1322 = vmatpush2.xpose.msra.mxu0 0.0
    %1323 = vmatprep.subr.mxu0 0.0
    %1324 = vmatpush2.xpose.msra.mxu0 0.0
    %1325 = vmatprep.subr.mxu0 0.0
    %1326 = vmatpush2.xpose.msra.mxu0 0.0
    %1327 = vmatprep.subr.mxu0 0.0
    %1328 = vmatpush2.xpose.msra.mxu0 0.0
    %1329 = vmatprep.subr.mxu0 0.0
    %1330 = vmatpush2.xpose.msra.mxu0 0.0
    %1331 = vmatprep.mubr.f32.mxu0 0.0
    %1332 = vmatmul.mubr.f32.gmra.mxu0 %v1263
    %v1333 = vpop.f32.mrf.mxu0
    %v1334 = vadd.f32 0.0, %v1333
    %v1335 = vpop.f32.mrf.mxu0
    %1336 = vdwg.mxu0
    %v1337 = vmul.f32 %v1256, 0.35355338
    %v1338 = vmul.f32 %v1334, 0.35355338
    %v1339 = vsel %vm165, %v1337, -inf
    %1340 = vmax.xlane.f32.xlu0 %v1339
    %v1341 = vpop.xlane.xlu0 %1340
    %v1342 = vsel %vm165, %v1338, -inf
    %1343 = vmax.xlane.f32.xlu0 %v1342
    %v1344 = vpop.xlane.xlu0 %1343
    %v1345 = vsub.f32 %v1337, %v1341
    %v1346 = vsub.f32 %v1338, %v1344
    %v1347 = vmul.f32 %v1345, 1.442695
    %v1348 = vpow.pop %v1347
    %v1349 = vmul.f32 %v1346, 1.442695
    %v1350 = vpow.pop %v1349
    %v1351 = vsel %vm165, %v1348, 0.0
    %1352 = vadd.xlane.f32.xlu0 %v1351
    %v1353 = vpop.xlane.xlu0 %1352
    %v1354 = vsel %vm165, %v1350, 0.0
    %1355 = vadd.xlane.f32.xlu0 %v1354
    %v1356 = vpop.xlane.xlu0 %1355
    %v1357 = vrcp.pop %v1353
    %v1358 = vrcp.pop %v1356
    %v1359 = vmul.f32 %v1348, %v1357
    %v1360 = vmul.f32 %v1350, %v1358
    %1361 = vrot.lane.b32.xlu0 %v154, 40
    %v1362 = vpop.permute.xlu0 %1361
    %v1365 = vsel %vm165, %v1359, 0
    %1367 = vmatprep.subr.mxu0 0.0
    %1368 = vmatpush1.msra.mxu0 0.0
    %1369 = vmatprep.subr.mxu0 0.0
    %1370 = vmatpush1.msra.mxu0 0.0
    %1371 = vmatprep.subr.mxu0 0.0
    %1372 = vmatpush1.msra.mxu0 0.0
    %1373 = vmatprep.subr.mxu0 0.0
    %1374 = vmatpush1.msra.mxu0 0.0
    %1375 = vmatprep.subr.mxu0 0.0
    %1376 = vmatpush1.msra.mxu0 0.0
    %1377 = vmatprep.subr.mxu0 0.0
    %1378 = vmatpush1.msra.mxu0 0.0
    %1379 = vmatprep.subr.mxu0 0.0
    %1380 = vmatpush1.msra.mxu0 0.0
    %1381 = vmatprep.subr.mxu0 0.0
    %1382 = vmatpush1.msra.mxu0 0.0
    %1383 = vmatprep.subr.mxu0 0.0
    %1384 = vmatpush1.msra.mxu0 0.0
    %1385 = vmatprep.subr.mxu0 0.0
    %1386 = vmatpush1.msra.mxu0 0.0
    %1387 = vmatprep.subr.mxu0 0.0
    %1388 = vmatpush1.msra.mxu0 0.0
    %1389 = vmatprep.subr.mxu0 0.0
    %1390 = vmatpush1.msra.mxu0 0.0
    %1391 = vmatprep.subr.mxu0 0.0
    %1392 = vmatpush1.msra.mxu0 0.0
    %1393 = vmatprep.subr.mxu0 0.0
    %1394 = vmatpush1.msra.mxu0 0.0
    %1395 = vmatprep.subr.mxu0 0.0
    %1396 = vmatpush1.msra.mxu0 0.0
    %1397 = vmatprep.subr.mxu0 0.0
    %1398 = vmatpush1.msra.mxu0 %v1362
    %1399 = vmatprep.subr.mxu0 0.0
    %1400 = vmatpush2.msra.mxu0 0.0
    %1401 = vmatprep.subr.mxu0 0.0
    %1402 = vmatpush2.msra.mxu0 0.0
    %1403 = vmatprep.subr.mxu0 0.0
    %1404 = vmatpush2.msra.mxu0 0.0
    %1405 = vmatprep.subr.mxu0 0.0
    %1406 = vmatpush2.msra.mxu0 0.0
    %1407 = vmatprep.subr.mxu0 0.0
    %1408 = vmatpush2.msra.mxu0 0.0
    %1409 = vmatprep.subr.mxu0 0.0
    %1410 = vmatpush2.msra.mxu0 0.0
    %1411 = vmatprep.subr.mxu0 0.0
    %1412 = vmatpush2.msra.mxu0 0.0
    %1413 = vmatprep.subr.mxu0 0.0
    %1414 = vmatpush2.msra.mxu0 0.0
    %1415 = vmatprep.subr.mxu0 0.0
    %1416 = vmatpush2.msra.mxu0 0.0
    %1417 = vmatprep.subr.mxu0 0.0
    %1418 = vmatpush2.msra.mxu0 0.0
    %1419 = vmatprep.subr.mxu0 0.0
    %1420 = vmatpush2.msra.mxu0 0.0
    %1421 = vmatprep.subr.mxu0 0.0
    %1422 = vmatpush2.msra.mxu0 0.0
    %1423 = vmatprep.subr.mxu0 0.0
    %1424 = vmatpush2.msra.mxu0 0.0
    %1425 = vmatprep.subr.mxu0 0.0
    %1426 = vmatpush2.msra.mxu0 0.0
    %1427 = vmatprep.subr.mxu0 0.0
    %1428 = vmatpush2.msra.mxu0 0.0
    %1429 = vmatprep.subr.mxu0 0.0
    %1430 = vmatpush2.msra.mxu0 0.0
    %1431 = vmatprep.mubr.f32.mxu0 0.0
    %1432 = vmatmul.mubr.f32.gmra.mxu0 %v1365
    %v1433 = vpop.f32.mrf.mxu0
    %v1434 = vadd.f32 0.0, %v1433
    %v1435 = vpop.f32.mrf.mxu0
    %1436 = vdwg.mxu0
    %1437 = vrot.lane.b32.xlu0 %v159, 40
    %v1438 = vpop.permute.xlu0 %1437
    %v1441 = vsel %vm165, %v1360, 0
    %1443 = vmatprep.subr.mxu0 0.0
    %1444 = vmatpush1.msra.mxu0 0.0
    %1445 = vmatprep.subr.mxu0 0.0
    %1446 = vmatpush1.msra.mxu0 0.0
    %1447 = vmatprep.subr.mxu0 0.0
    %1448 = vmatpush1.msra.mxu0 0.0
    %1449 = vmatprep.subr.mxu0 0.0
    %1450 = vmatpush1.msra.mxu0 0.0
    %1451 = vmatprep.subr.mxu0 0.0
    %1452 = vmatpush1.msra.mxu0 0.0
    %1453 = vmatprep.subr.mxu0 0.0
    %1454 = vmatpush1.msra.mxu0 0.0
    %1455 = vmatprep.subr.mxu0 0.0
    %1456 = vmatpush1.msra.mxu0 0.0
    %1457 = vmatprep.subr.mxu0 0.0
    %1458 = vmatpush1.msra.mxu0 0.0
    %1459 = vmatprep.subr.mxu0 0.0
    %1460 = vmatpush1.msra.mxu0 0.0
    %1461 = vmatprep.subr.mxu0 0.0
    %1462 = vmatpush1.msra.mxu0 0.0
    %1463 = vmatprep.subr.mxu0 0.0
    %1464 = vmatpush1.msra.mxu0 0.0
    %1465 = vmatprep.subr.mxu0 0.0
    %1466 = vmatpush1.msra.mxu0 0.0
    %1467 = vmatprep.subr.mxu0 0.0
    %1468 = vmatpush1.msra.mxu0 0.0
    %1469 = vmatprep.subr.mxu0 0.0
    %1470 = vmatpush1.msra.mxu0 0.0
    %1471 = vmatprep.subr.mxu0 0.0
    %1472 = vmatpush1.msra.mxu0 0.0
    %1473 = vmatprep.subr.mxu0 0.0
    %1474 = vmatpush1.msra.mxu0 %v1438
    %1475 = vmatprep.subr.mxu0 0.0
    %1476 = vmatpush2.msra.mxu0 0.0
    %1477 = vmatprep.subr.mxu0 0.0
    %1478 = vmatpush2.msra.mxu0 0.0
    %1479 = vmatprep.subr.mxu0 0.0
    %1480 = vmatpush2.msra.mxu0 0.0
    %1481 = vmatprep.subr.mxu0 0.0
    %1482 = vmatpush2.msra.mxu0 0.0
    %1483 = vmatprep.subr.mxu0 0.0
    %1484 = vmatpush2.msra.mxu0 0.0
    %1485 = vmatprep.subr.mxu0 0.0
    %1486 = vmatpush2.msra.mxu0 0.0
    %1487 = vmatprep.subr.mxu0 0.0
    %1488 = vmatpush2.msra.mxu0 0.0
    %1489 = vmatprep.subr.mxu0 0.0
    %1490 = vmatpush2.msra.mxu0 0.0
    %1491 = vmatprep.subr.mxu0 0.0
    %1492 = vmatpush2.msra.mxu0 0.0
    %1493 = vmatprep.subr.mxu0 0.0
    %1494 = vmatpush2.msra.mxu0 0.0
    %1495 = vmatprep.subr.mxu0 0.0
    %1496 = vmatpush2.msra.mxu0 0.0
    %1497 = vmatprep.subr.mxu0 0.0
    %1498 = vmatpush2.msra.mxu0 0.0
    %1499 = vmatprep.subr.mxu0 0.0
    %1500 = vmatpush2.msra.mxu0 0.0
    %1501 = vmatprep.subr.mxu0 0.0
    %1502 = vmatpush2.msra.mxu0 0.0
    %1503 = vmatprep.subr.mxu0 0.0
    %1504 = vmatpush2.msra.mxu0 0.0
    %1505 = vmatprep.subr.mxu0 0.0
    %1506 = vmatpush2.msra.mxu0 0.0
    %1507 = vmatprep.mubr.f32.mxu0 0.0
    %1508 = vmatmul.mubr.f32.gmra.mxu0 %v1441
    %v1509 = vpop.f32.mrf.mxu0
    %v1510 = vadd.f32 0.0, %v1509
    %v1511 = vpop.f32.mrf.mxu0
    %1512 = vdwg.mxu0
    %1515 = vrot.lane.b32.xlu0 %v1434, 24
    %v1516 = vpop.permute.xlu0 %1515
    %1517 = vrot.lane.b32.xlu0 %v1510, 24
    %v1518 = vpop.permute.xlu0 %1517
    %vm1521 = vcmask 261312
    %1522 = vst.msk [vmem:[#allocation2] sm:$0xff] %vm1521, %v1516
    %1523 = vst.msk [vmem:[#allocation2 + $0x8] sm:$0xff] %vm1521, %v1518
    %v1524 = vld [vmem:[#allocation2] sm:$0xff]
    %v1525 = vld [vmem:[#allocation2 + $0x8] sm:$0xff]
    %v1526 = vld [vmem:[%s3] sm:$0xff]
    %v1527 = vld [vmem:[%s3 + $0x8] sm:$0xff]
    %v1528 = vld [vmem:[%s3 + $0x10] sm:$0xff]
    %v1529 = vld [vmem:[%s3 + $0x18] sm:$0xff]
    %v1530 = vld [vmem:[%s4] sm:$0x1]
    %v1532 = vlaneseq
    %v1533 = vshrl.u32 %v1532, 7
    %v1534 = vsub.s32 0, %v1533
    %v1535 = vrot.slane %v1530, %v1534
    %v1538 = vsel %vm80, %v1524, 0
    %v1541 = vsel %vm80, %v1525, 0
    %1543 = vmatprep.subr.mxu0 0.0
    %1544 = vmatpush1.msra.mxu0 0.0
    %1545 = vmatprep.subr.mxu0 0.0
    %1546 = vmatpush1.msra.mxu0 0.0
    %1547 = vmatprep.subr.mxu0 0.0
    %1548 = vmatpush1.msra.mxu0 0.0
    %1549 = vmatprep.subr.mxu0 0.0
    %1550 = vmatpush1.msra.mxu0 0.0
    %1551 = vmatprep.subr.mxu0 0.0
    %1552 = vmatpush1.msra.mxu0 0.0
    %1553 = vmatprep.subr.mxu0 0.0
    %1554 = vmatpush1.msra.mxu0 0.0
    %1555 = vmatprep.subr.mxu0 0.0
    %1556 = vmatpush1.msra.mxu0 0.0
    %1557 = vmatprep.subr.mxu0 0.0
    %1558 = vmatpush1.msra.mxu0 0.0
    %1559 = vmatprep.subr.mxu0 0.0
    %1560 = vmatpush1.msra.mxu0 0.0
    %1561 = vmatprep.subr.mxu0 0.0
    %1562 = vmatpush1.msra.mxu0 0.0
    %1563 = vmatprep.subr.mxu0 0.0
    %1564 = vmatpush1.msra.mxu0 0.0
    %1565 = vmatprep.subr.mxu0 0.0
    %1566 = vmatpush1.msra.mxu0 0.0
    %1567 = vmatprep.subr.mxu0 0.0
    %1568 = vmatpush1.msra.mxu0 %v1529
    %1569 = vmatprep.subr.mxu0 0.0
    %1570 = vmatpush1.msra.mxu0 %v1528
    %1571 = vmatprep.subr.mxu0 0.0
    %1572 = vmatpush1.msra.mxu0 %v1527
    %1573 = vmatprep.subr.mxu0 0.0
    %1574 = vmatpush1.msra.mxu0 %v1526
    %1575 = vmatprep.subr.mxu0 0.0
    %1576 = vmatpush2.msra.mxu0 0.0
    %1577 = vmatprep.subr.mxu0 0.0
    %1578 = vmatpush2.msra.mxu0 0.0
    %1579 = vmatprep.subr.mxu0 0.0
    %1580 = vmatpush2.msra.mxu0 0.0
    %1581 = vmatprep.subr.mxu0 0.0
    %1582 = vmatpush2.msra.mxu0 0.0
    %1583 = vmatprep.subr.mxu0 0.0
    %1584 = vmatpush2.msra.mxu0 0.0
    %1585 = vmatprep.subr.mxu0 0.0
    %1586 = vmatpush2.msra.mxu0 0.0
    %1587 = vmatprep.subr.mxu0 0.0
    %1588 = vmatpush2.msra.mxu0 0.0
    %1589 = vmatprep.subr.mxu0 0.0
    %1590 = vmatpush2.msra.mxu0 0.0
    %1591 = vmatprep.subr.mxu0 0.0
    %1592 = vmatpush2.msra.mxu0 0.0
    %1593 = vmatprep.subr.mxu0 0.0
    %1594 = vmatpush2.msra.mxu0 0.0
    %1595 = vmatprep.subr.mxu0 0.0
    %1596 = vmatpush2.msra.mxu0 0.0
    %1597 = vmatprep.subr.mxu0 0.0
    %1598 = vmatpush2.msra.mxu0 0.0
    %1599 = vmatprep.subr.mxu0 0.0
    %1600 = vmatpush2.msra.mxu0 0.0
    %1601 = vmatprep.subr.mxu0 0.0
    %1602 = vmatpush2.msra.mxu0 0.0
    %1603 = vmatprep.subr.mxu0 0.0
    %1604 = vmatpush2.msra.mxu0 0.0
    %1605 = vmatprep.subr.mxu0 0.0
    %1606 = vmatpush2.msra.mxu0 0.0
    %1607 = vmatprep.mubr.f32.mxu0 0.0
    %1608 = vmatmul.mubr.f32.gmra.mxu0 %v1538
    %v1609 = vpop.f32.mrf.mxu0
    %v1610 = vadd.f32 %v1535, %v1609
    %v1611 = vpop.f32.mrf.mxu0
    %1612 = vmatprep.mubr.f32.mxu0 0.0
    %1613 = vmatmul.mubr.f32.gmra.mxu0 %v1541
    %v1614 = vpop.f32.mrf.mxu0
    %v1615 = vadd.f32 %v1535, %v1614
    %v1616 = vpop.f32.mrf.mxu0
    %1617 = vdwg.mxu0
    %v1618 = vmax.f32 %v1610, -100.0
    %v1619 = vmax.f32 %v1615, -100.0
    %v1620 = vmin.f32 %v1618, 100.0
    %v1621 = vmin.f32 %v1619, 100.0
    %v1622 = vadd.f32 %v67, %v1620
    %v1623 = vadd.f32 %v68, %v1621
    %v1624 = vld [vmem:[%s9] sm:$0x1]
    %v1625 = vld [vmem:[%s10] sm:$0x1]
    %v1626 = vsel %vm80, %v1622, 0.0
    %1627 = vadd.xlane.f32.xlu0 %v1626
    %v1628 = vpop.xlane.xlu0 %1627
    %v1629 = vsel %vm80, %v1623, 0.0
    %1630 = vadd.xlane.f32.xlu0 %v1629
    %v1631 = vpop.xlane.xlu0 %1630
    %v1632 = vrcp.pop 32.0
    %v1633 = vmul.f32 %v1628, %v1632
    %v1634 = vmul.f32 %v1631, %v1632
    %v1635 = vsub.f32 %v1622, %v1633
    %v1636 = vsub.f32 %v1623, %v1634
    %v1637 = vmul.f32 %v1635, %v1635
    %v1638 = vmul.f32 %v1636, %v1636
    %v1639 = vsel %vm80, %v1637, 0.0
    %1640 = vadd.xlane.f32.xlu0 %v1639
    %v1641 = vpop.xlane.xlu0 %1640
    %v1642 = vsel %vm80, %v1638, 0.0
    %1643 = vadd.xlane.f32.xlu0 %v1642
    %v1644 = vpop.xlane.xlu0 %1643
    %v1645 = vmul.f32 %v1641, %v1632
    %v1646 = vmul.f32 %v1644, %v1632
    %v1647 = vadd.f32 %v1645, 1e-05
    %v1648 = vadd.f32 %v1646, 1e-05
    %v1649 = vrsqrt.pop %v1647
    %v1650 = vrsqrt.pop %v1648
    %v1651 = vmul.f32 %v1635, %v1649
    %v1652 = vmul.f32 %v1636, %v1650
    %v1654 = vlaneseq
    %v1655 = vshrl.u32 %v1654, 7
    %v1656 = vsub.s32 0, %v1655
    %v1657 = vrot.slane %v1624, %v1656
    %v1659 = vmul.f32 %v1651, %v1657
    %v1660 = vmul.f32 %v1652, %v1657
    %v1662 = vlaneseq
    %v1663 = vshrl.u32 %v1662, 7
    %v1664 = vsub.s32 0, %v1663
    %v1665 = vrot.slane %v1625, %v1664
    %v1667 = vadd.f32 %v1659, %v1665
    %v1668 = vadd.f32 %v1660, %v1665
    %v1669 = vld [vmem:[%s5] sm:$0xff]
    %v1670 = vld [vmem:[%s5 + $0x8] sm:$0xff]
    %v1671 = vld [vmem:[%s5 + $0x10] sm:$0xff]
    %v1672 = vld [vmem:[%s5 + $0x18] sm:$0xff]
    %v1673 = vld [vmem:[%s6] sm:$0x1]
    %v1675 = vlaneseq
    %v1676 = vshrl.u32 %v1675, 7
    %v1677 = vsub.s32 0, %v1676
    %v1678 = vrot.slane %v1673, %v1677
    %v1681 = vsel %vm80, %v1667, 0
    %v1684 = vsel %vm80, %v1668, 0
    %1686 = vmatprep.subr.mxu0 0.0
    %1687 = vmatpush1.msra.mxu0 0.0
    %1688 = vmatprep.subr.mxu0 0.0
    %1689 = vmatpush1.msra.mxu0 0.0
    %1690 = vmatprep.subr.mxu0 0.0
    %1691 = vmatpush1.msra.mxu0 0.0
    %1692 = vmatprep.subr.mxu0 0.0
    %1693 = vmatpush1.msra.mxu0 0.0
    %1694 = vmatprep.subr.mxu0 0.0
    %1695 = vmatpush1.msra.mxu0 0.0
    %1696 = vmatprep.subr.mxu0 0.0
    %1697 = vmatpush1.msra.mxu0 0.0
    %1698 = vmatprep.subr.mxu0 0.0
    %1699 = vmatpush1.msra.mxu0 0.0
    %1700 = vmatprep.subr.mxu0 0.0
    %1701 = vmatpush1.msra.mxu0 0.0
    %1702 = vmatprep.subr.mxu0 0.0
    %1703 = vmatpush1.msra.mxu0 0.0
    %1704 = vmatprep.subr.mxu0 0.0
    %1705 = vmatpush1.msra.mxu0 0.0
    %1706 = vmatprep.subr.mxu0 0.0
    %1707 = vmatpush1.msra.mxu0 0.0
    %1708 = vmatprep.subr.mxu0 0.0
    %1709 = vmatpush1.msra.mxu0 0.0
    %1710 = vmatprep.subr.mxu0 0.0
    %1711 = vmatpush1.msra.mxu0 %v1672
    %1712 = vmatprep.subr.mxu0 0.0
    %1713 = vmatpush1.msra.mxu0 %v1671
    %1714 = vmatprep.subr.mxu0 0.0
    %1715 = vmatpush1.msra.mxu0 %v1670
    %1716 = vmatprep.subr.mxu0 0.0
    %1717 = vmatpush1.msra.mxu0 %v1669
    %1718 = vmatprep.subr.mxu0 0.0
    %1719 = vmatpush2.msra.mxu0 0.0
    %1720 = vmatprep.subr.mxu0 0.0
    %1721 = vmatpush2.msra.mxu0 0.0
    %1722 = vmatprep.subr.mxu0 0.0
    %1723 = vmatpush2.msra.mxu0 0.0
    %1724 = vmatprep.subr.mxu0 0.0
    %1725 = vmatpush2.msra.mxu0 0.0
    %1726 = vmatprep.subr.mxu0 0.0
    %1727 = vmatpush2.msra.mxu0 0.0
    %1728 = vmatprep.subr.mxu0 0.0
    %1729 = vmatpush2.msra.mxu0 0.0
    %1730 = vmatprep.subr.mxu0 0.0
    %1731 = vmatpush2.msra.mxu0 0.0
    %1732 = vmatprep.subr.mxu0 0.0
    %1733 = vmatpush2.msra.mxu0 0.0
    %1734 = vmatprep.subr.mxu0 0.0
    %1735 = vmatpush2.msra.mxu0 0.0
    %1736 = vmatprep.subr.mxu0 0.0
    %1737 = vmatpush2.msra.mxu0 0.0
    %1738 = vmatprep.subr.mxu0 0.0
    %1739 = vmatpush2.msra.mxu0 0.0
    %1740 = vmatprep.subr.mxu0 0.0
    %1741 = vmatpush2.msra.mxu0 0.0
    %1742 = vmatprep.subr.mxu0 0.0
    %1743 = vmatpush2.msra.mxu0 0.0
    %1744 = vmatprep.subr.mxu0 0.0
    %1745 = vmatpush2.msra.mxu0 0.0
    %1746 = vmatprep.subr.mxu0 0.0
    %1747 = vmatpush2.msra.mxu0 0.0
    %1748 = vmatprep.subr.mxu0 0.0
    %1749 = vmatpush2.msra.mxu0 0.0
    %1750 = vmatprep.mubr.f32.mxu0 0.0
    %1751 = vmatmul.mubr.f32.gmra.mxu0 %v1681
    %v1752 = vpop.f32.mrf.mxu0
    %v1753 = vadd.f32 %v1678, %v1752
    %v1754 = vpop.f32.mrf.mxu0
    %1755 = vmatprep.mubr.f32.mxu0 0.0
    %1756 = vmatmul.mubr.f32.gmra.mxu0 %v1684
    %v1757 = vpop.f32.mrf.mxu0
    %v1758 = vadd.f32 %v1678, %v1757
    %v1759 = vpop.f32.mrf.mxu0
    %1760 = vdwg.mxu0
    %v1761 = vmul.f32 %v1753, 0.5
    %v1762 = vmul.f32 %v1758, 0.5
    %v1763 = vmul.f32 %v1753, 0.044715
    %v1764 = vmul.f32 %v1758, 0.044715
    %v1765 = vmul.f32 %v1763, %v1753
    %v1766 = vmul.f32 %v1764, %v1758
    %v1767 = vmul.f32 %v1765, %v1753
    %v1768 = vmul.f32 %v1766, %v1758
    %v1769 = vadd.f32 %v1753, %v1767
    %v1770 = vadd.f32 %v1758, %v1768
    %v1771 = vmul.f32 %v1769, 0.7978846
    %v1772 = vmul.f32 %v1770, 0.7978846
    %v1773 = vtanh.pop %v1771
    %v1774 = vtanh.pop %v1772
    %v1775 = vadd.f32 %v1773, 1.0
    %v1776 = vadd.f32 %v1774, 1.0
    %v1777 = vmul.f32 %v1761, %v1775
    %v1778 = vmul.f32 %v1762, %v1776
    %v1779 = vld [vmem:[%s7] sm:$0xff]
    %v1780 = vld [vmem:[%s7 + $0x8] sm:$0xff]
    %v1781 = vld [vmem:[%s7 + $0x10] sm:$0xff]
    %v1782 = vld [vmem:[%s7 + $0x18] sm:$0xff]
    %v1783 = vld [vmem:[%s7 + $0x20] sm:$0xff]
    %v1784 = vld [vmem:[%s7 + $0x28] sm:$0xff]
    %v1785 = vld [vmem:[%s7 + $0x30] sm:$0xff]
    %v1786 = vld [vmem:[%s7 + $0x38] sm:$0xff]
    %v1787 = vld [vmem:[%s8] sm:$0x1]
    %v1789 = vlaneseq
    %v1790 = vshrl.u32 %v1789, 7
    %v1791 = vsub.s32 0, %v1790
    %v1792 = vrot.slane %v1787, %v1791
    %vm1794 = vcmask 523264
    %v1796 = vsel %vm1794, %v1777, 0
    %v1799 = vsel %vm1794, %v1778, 0
    %1801 = vmatprep.subr.mxu0 0.0
    %1802 = vmatpush1.msra.mxu0 0.0
    %1803 = vmatprep.subr.mxu0 0.0
    %1804 = vmatpush1.msra.mxu0 0.0
    %1805 = vmatprep.subr.mxu0 0.0
    %1806 = vmatpush1.msra.mxu0 0.0
    %1807 = vmatprep.subr.mxu0 0.0
    %1808 = vmatpush1.msra.mxu0 0.0
    %1809 = vmatprep.subr.mxu0 0.0
    %1810 = vmatpush1.msra.mxu0 0.0
    %1811 = vmatprep.subr.mxu0 0.0
    %1812 = vmatpush1.msra.mxu0 0.0
    %1813 = vmatprep.subr.mxu0 0.0
    %1814 = vmatpush1.msra.mxu0 0.0
    %1815 = vmatprep.subr.mxu0 0.0
    %1816 = vmatpush1.msra.mxu0 0.0
    %1817 = vmatprep.subr.mxu0 0.0
    %1818 = vmatpush1.msra.mxu0 %v1786
    %1819 = vmatprep.subr.mxu0 0.0
    %1820 = vmatpush1.msra.mxu0 %v1785
    %1821 = vmatprep.subr.mxu0 0.0
    %1822 = vmatpush1.msra.mxu0 %v1784
    %1823 = vmatprep.subr.mxu0 0.0
    %1824 = vmatpush1.msra.mxu0 %v1783
    %1825 = vmatprep.subr.mxu0 0.0
    %1826 = vmatpush1.msra.mxu0 %v1782
    %1827 = vmatprep.subr.mxu0 0.0
    %1828 = vmatpush1.msra.mxu0 %v1781
    %1829 = vmatprep.subr.mxu0 0.0
    %1830 = vmatpush1.msra.mxu0 %v1780
    %1831 = vmatprep.subr.mxu0 0.0
    %1832 = vmatpush1.msra.mxu0 %v1779
    %1833 = vmatprep.subr.mxu0 0.0
    %1834 = vmatpush2.msra.mxu0 0.0
    %1835 = vmatprep.subr.mxu0 0.0
    %1836 = vmatpush2.msra.mxu0 0.0
    %1837 = vmatprep.subr.mxu0 0.0
    %1838 = vmatpush2.msra.mxu0 0.0
    %1839 = vmatprep.subr.mxu0 0.0
    %1840 = vmatpush2.msra.mxu0 0.0
    %1841 = vmatprep.subr.mxu0 0.0
    %1842 = vmatpush2.msra.mxu0 0.0
    %1843 = vmatprep.subr.mxu0 0.0
    %1844 = vmatpush2.msra.mxu0 0.0
    %1845 = vmatprep.subr.mxu0 0.0
    %1846 = vmatpush2.msra.mxu0 0.0
    %1847 = vmatprep.subr.mxu0 0.0
    %1848 = vmatpush2.msra.mxu0 0.0
    %1849 = vmatprep.subr.mxu0 0.0
    %1850 = vmatpush2.msra.mxu0 0.0
    %1851 = vmatprep.subr.mxu0 0.0
    %1852 = vmatpush2.msra.mxu0 0.0
    %1853 = vmatprep.subr.mxu0 0.0
    %1854 = vmatpush2.msra.mxu0 0.0
    %1855 = vmatprep.subr.mxu0 0.0
    %1856 = vmatpush2.msra.mxu0 0.0
    %1857 = vmatprep.subr.mxu0 0.0
    %1858 = vmatpush2.msra.mxu0 0.0
    %1859 = vmatprep.subr.mxu0 0.0
    %1860 = vmatpush2.msra.mxu0 0.0
    %1861 = vmatprep.subr.mxu0 0.0
    %1862 = vmatpush2.msra.mxu0 0.0
    %1863 = vmatprep.subr.mxu0 0.0
    %1864 = vmatpush2.msra.mxu0 0.0
    %1865 = vmatprep.mubr.f32.mxu0 0.0
    %1866 = vmatmul.mubr.f32.gmra.mxu0 %v1796
    %v1867 = vpop.f32.mrf.mxu0
    %v1868 = vadd.f32 %v1792, %v1867
    %v1869 = vpop.f32.mrf.mxu0
    %1870 = vmatprep.mubr.f32.mxu0 0.0
    %1871 = vmatmul.mubr.f32.gmra.mxu0 %v1799
    %v1872 = vpop.f32.mrf.mxu0
    %v1873 = vadd.f32 %v1792, %v1872
    %v1874 = vpop.f32.mrf.mxu0
    %1875 = vdwg.mxu0
    %v1876 = vmax.f32 %v1868, -100.0
    %v1877 = vmax.f32 %v1873, -100.0
    %v1878 = vmin.f32 %v1876, 100.0
    %v1879 = vmin.f32 %v1877, 100.0
    %v1880 = vadd.f32 %v1667, %v1878
    %v1881 = vadd.f32 %v1668, %v1879
    %v1882 = vld [vmem:[%s11] sm:$0x1]
    %v1883 = vld [vmem:[%s12] sm:$0x1]
    %v1884 = vsel %vm80, %v1880, 0.0
    %1885 = vadd.xlane.f32.xlu0 %v1884
    %v1886 = vpop.xlane.xlu0 %1885
    %v1887 = vsel %vm80, %v1881, 0.0
    %1888 = vadd.xlane.f32.xlu0 %v1887
    %v1889 = vpop.xlane.xlu0 %1888
    %v1890 = vmul.f32 %v1886, %v1632
    %v1891 = vmul.f32 %v1889, %v1632
    %v1892 = vsub.f32 %v1880, %v1890
    %v1893 = vsub.f32 %v1881, %v1891
    %v1894 = vmul.f32 %v1892, %v1892
    %v1895 = vmul.f32 %v1893, %v1893
    %v1896 = vsel %vm80, %v1894, 0.0
    %1897 = vadd.xlane.f32.xlu0 %v1896
    %v1898 = vpop.xlane.xlu0 %1897
    %v1899 = vsel %vm80, %v1895, 0.0
    %1900 = vadd.xlane.f32.xlu0 %v1899
    %v1901 = vpop.xlane.xlu0 %1900
    %v1902 = vmul.f32 %v1898, %v1632
    %v1903 = vmul.f32 %v1901, %v1632
    %v1904 = vadd.f32 %v1902, 1e-05
    %v1905 = vadd.f32 %v1903, 1e-05
    %v1906 = vrsqrt.pop %v1904
    %v1907 = vrsqrt.pop %v1905
    %v1908 = vmul.f32 %v1892, %v1906
    %v1909 = vmul.f32 %v1893, %v1907
    %v1911 = vlaneseq
    %v1912 = vshrl.u32 %v1911, 7
    %v1913 = vsub.s32 0, %v1912
    %v1914 = vrot.slane %v1882, %v1913
    %v1916 = vmul.f32 %v1908, %v1914
    %v1917 = vmul.f32 %v1909, %v1914
    %v1919 = vlaneseq
    %v1920 = vshrl.u32 %v1919, 7
    %v1921 = vsub.s32 0, %v1920
    %v1922 = vrot.slane %v1883, %v1921
    %v1924 = vadd.f32 %v1916, %v1922
    %v1925 = vadd.f32 %v1917, %v1922
    %v1926 = vsel %vm80, %v1924, 0.0
    %v1927 = vrot.slane %v1926, 4
    %v1928 = vadd.f32 %v1926, %v1927
    %v1929 = vrot.slane %v1928, 2
    %v1930 = vadd.f32 %v1928, %v1929
    %v1931 = vrot.slane %v1930, 1
    %v1932 = vadd.f32 %v1930, %v1931
    %v1933 = vsel %vm80, %v1925, 0.0
    %v1934 = vrot.slane %v1933, 4
    %v1935 = vadd.f32 %v1933, %v1934
    %v1936 = vrot.slane %v1935, 2
    %v1937 = vadd.f32 %v1935, %v1936
    %v1938 = vrot.slane %v1937, 1
    %v1939 = vadd.f32 %v1937, %v1938
    %v1940 = vrcp.pop 8.0
    %v1941 = vmul.f32 %v1932, %v1940
    %v1942 = vmul.f32 %v1939, %v1940
    %vm1943 = vcmp.ne.f32.partialorder %v1941, %v1941
    %vm1944 = vcmp.ne.f32.partialorder %v1942, %v1942
    %v1945 = vsel %vm1943, 0.0, %v1941
    %v1946 = vsel %vm1944, 0.0, %v1942
    %v1947 = vmax.f32 %v1945, -100.0
    %v1948 = vmax.f32 %v1946, -100.0
    %v1949 = vmin.f32 %v1947, 100.0
    %v1950 = vmin.f32 %v1948, 100.0
    %vm1953 = vcmask 1041409
    %v1954 = vsel %vm1953, %v1950, %v1949
    %vm1956 = vcmask 254976
    %1957 = vst.msk [vmem:[#allocation6] sm:$0x3] %vm1956, %v1954
    // Predicated region
    $region58: #{tpu_custom_call.1} parent=1 // pred_check
      _
    $region59: #{tpu_custom_call.1} parent=1 // pred_check_branch
      %1959 = sbr.rel (0) target = $region61
    $region60: #{tpu_custom_call.1} parent=1 // pred_region
      %s1961 = ssub.s32 32, 32
      %1962 = vsyncadd [#allocation5], %s1961
      %s1964 = sshll.u32 [#allocation6], 4
      %s1965 = int_to_ptr.vmem [resolvable:$true] %s1964
      %1967 = dma.vmem_to_hbm [thread:$0]  %s1965, 32, %s13, [#allocation5]
    $region61: #{tpu_custom_call.1} parent=1 // pred_fallthru
      _
    // Predicated region
    $region62: #{tpu_custom_call.1} parent=1 // pred_check
      _
    $region63: #{tpu_custom_call.1} parent=1 // pred_check_branch
      %1969 = sbr.rel (0) target = $region65
    $region64: #{tpu_custom_call.1} parent=1 // pred_region
      %1970 = dma.done [#allocation5], 32
    $region65: #{tpu_custom_call.1} parent=1 // pred_fallthru
      _
    %1971 = vsyncpa [#allocation4], 1
    %1972 = vsyncpa [#allocation5], 1

</llo_original>
